<compile_context>
chip_gen: v7x
topology: tpu7x:2x2x1
jax: 0.10.0
libtpu: 0.0.40
codegen_flags: <defaults>
</compile_context>

<pallas_src>
import functools
import math

import jax
import jax.numpy as jnp
from jax.experimental import pallas as pl
from jax.experimental.pallas import tpu as pltpu


def _feature_fuse_kernel(x_ref, src_ref,
                         wq_ref, bq_ref, wkv_ref, bkv_ref,
                         wm_ref, bm_ref,
                         w1x_ref, w1m_ref, b1_ref, w2_ref, b2_ref,
                         out_ref, *, num_heads, eps, matmul_dtype):
    mm = matmul_dtype
    x_ncw = x_ref[...]                                  # (Bb, D, N) f32
    Bb, D, N = x_ncw.shape
    M = src_ref.shape[2]
    H = num_heads
    dim = D // H
    scale = 1.0 / math.sqrt(dim)

    # On-chip NCW -> channels-last relayout (replaces wrapper HBM-round-trip transposes).
    xf = jnp.swapaxes(x_ncw, 1, 2).reshape(Bb * N, D).astype(mm)         # (Bb*N, D)
    sf = jnp.swapaxes(src_ref[...], 1, 2).reshape(Bb * M, D).astype(mm)  # (Bb*M, D)

    # 1x1 Conv1d == matmul over the channel axis (weights pre-transposed to (in, out)).
    # K and V are fused into one matmul; biases added in f32 after MXU accumulation.
    q = jnp.dot(xf, wq_ref[...], preferred_element_type=jnp.float32) + bq_ref[...]
    kv = jnp.dot(sf, wkv_ref[...], preferred_element_type=jnp.float32) + bkv_ref[...]
    k = kv[:, :D]
    v = kv[:, D:]

    # Multi-head attention.  Head channels were made contiguous by permuting the
    # projection-weight columns in the wrapper, so each head is a contiguous slice.
    msgs = []
    for h in range(H):
        sl = slice(h * dim, (h + 1) * dim)
        qh = (q[:, sl] * scale).reshape(Bb, N, dim).astype(mm)
        kh = k[:, sl].reshape(Bb, M, dim).astype(mm)
        vh = v[:, sl].reshape(Bb, M, dim).astype(mm)
        s = jnp.einsum('bnd,bmd->bnm', qh, kh,
                       preferred_element_type=jnp.float32)               # (Bb, N, M)
        s = s - jnp.max(s, axis=-1, keepdims=True)
        p = jnp.exp(s)
        p = p * pl.reciprocal(jnp.sum(p, axis=-1, keepdims=True), approx=False)
        msgs.append(jnp.einsum('bnm,bmd->bnd', p.astype(mm), vh,
                               preferred_element_type=jnp.float32))       # (Bb, N, dim)
    message = msgs[0] if H == 1 else jnp.concatenate(msgs, axis=-1)
    message = message.reshape(Bb * N, D)

    # merge projection (wm rows pre-permuted in the wrapper to undo head-contiguous order)
    message = (jnp.dot(message.astype(mm), wm_ref[...],
                       preferred_element_type=jnp.float32) + bm_ref[...])

    # MLP([2D, 2D, D]): concat([x, message]) folded into split weights W1_x / W1_m.
    h1 = (jnp.dot(xf, w1x_ref[...], preferred_element_type=jnp.float32)
          + jnp.dot(message.astype(mm), w1m_ref[...], preferred_element_type=jnp.float32)
          + b1_ref[...])                                                  # (Bb*N, 2D)

    # InstanceNorm1d (affine=False): normalize over the sequence axis per (batch, channel).
    h1 = h1.reshape(Bb, N, 2 * D)
    mu = jnp.mean(h1, axis=1, keepdims=True)
    var = jnp.mean((h1 - mu) ** 2, axis=1, keepdims=True)
    h1 = (h1 - mu) * jax.lax.rsqrt(var + eps)
    h1 = jnp.maximum(h1, 0.0).reshape(Bb * N, 2 * D)

    h2 = jnp.dot(h1.astype(mm), w2_ref[...],
                 preferred_element_type=jnp.float32) + b2_ref[...]        # (Bb*N, D)

    # residual, stored back in NCW (lane axis = N)
    out_ref[...] = x_ncw + jnp.swapaxes(h2.reshape(Bb, N, D), 1, 2)


def _prep_weights(params, num_heads, matmul_dtype):
    """Fold head interleave / K|V fusion / concat-split into the weights.

    In deployment these tiny reorderings would be precomputed once per checkpoint.
    """
    D = params["wq"].shape[0]
    H = num_heads
    dim = D // H
    # new channel c' = h*dim + d  holds the torch channel c = d*H + h (head-contiguous)
    perm = jnp.arange(D).reshape(dim, H).T.reshape(-1)

    def wt(w):                       # torch Conv1d weight (out, in) -> (in, out)
        return jnp.transpose(w, (1, 0))

    wq_t = wt(params["wq"])[:, perm]
    wk_t = wt(params["wk"])[:, perm]
    wv_t = wt(params["wv"])[:, perm]
    wkv_t = jnp.concatenate([wk_t, wv_t], axis=1)                 # (D, 2D)
    wm_t = wt(params["wm"])[perm, :]                              # rows permuted back
    w1_t = wt(params["w1"])                                       # (2D, 2D)
    w1x_t, w1m_t = w1_t[:D, :], w1_t[D:, :]
    w2_t = wt(params["w2"])                                       # (2D, D)

    bq = params["bq"][perm].reshape(1, D)
    bkv = jnp.concatenate([params["bk"][perm], params["bv"][perm]]).reshape(1, 2 * D)
    bm = params["bm"].reshape(1, D)
    b1 = params["b1"].reshape(1, 2 * D)
    b2 = params["b2"].reshape(1, D)

    c = lambda w: w.astype(matmul_dtype)        # matmul operands (bf16 on v6e/v7x)
    f = lambda b: b.astype(jnp.float32)         # biases stay f32 (post-accumulation add)
    return (c(wq_t), f(bq), c(wkv_t), f(bkv), c(wm_t), f(bm),
            c(w1x_t), c(w1m_t), f(b1), c(w2_t), f(b2))


def feature_fuse(x_ncw, src_ncw, params, *, num_heads=1, eps=1e-5,
                 matmul_dtype=jnp.bfloat16, block_b=8):
    """x_ncw: (B, D, N), src_ncw: (B, D, M) — PyTorch Conv1d (NCW) layout in and out."""
    B, D, N = x_ncw.shape
    M = src_ncw.shape[2]
    assert D % num_heads == 0

    weight_args = _prep_weights(params, num_heads, matmul_dtype)

    # batch block size: amortize per-grid-step overhead and widen the MXU matmuls
    bb = min(block_b, B)
    while B % bb:
        bb -= 1
    grid = (B // bb,)

    full = lambda a: pl.BlockSpec(a.shape, lambda i: (0,) * a.ndim)

    # TODO(synk): for very long sequences (v7x: 64 MiB VMEM) tile N and stream K/V
    # flash-style; the InstanceNorm over N then needs a cross-tile mean/var accumulator.
    out = pl.pallas_call(
        functools.partial(_feature_fuse_kernel, num_heads=num_heads, eps=eps,
                          matmul_dtype=matmul_dtype),
        out_shape=jax.ShapeDtypeStruct((B, D, N), jnp.float32),
        grid_spec=pltpu.PrefetchScalarGridSpec(
            num_scalar_prefetch=0,
            grid=grid,
            in_specs=[
                pl.BlockSpec((bb, D, N), lambda i: (i, 0, 0)),
                pl.BlockSpec((bb, D, M), lambda i: (i, 0, 0)),
            ] + [full(a) for a in weight_args],
            out_specs=pl.BlockSpec((bb, D, N), lambda i: (i, 0, 0)),
        ),
        compiler_params=pltpu.CompilerParams(
            dimension_semantics=("parallel",),
            vmem_limit_bytes=64 * 1024 * 1024),
    )(x_ncw.astype(jnp.float32), src_ncw.astype(jnp.float32), *weight_args)

    return out


def feature_fuse_ref(x_ncw, src_ncw, p, *, num_heads=1, eps=1e-5):
    """Pure-JAX reference mirroring the PyTorch module exactly (NCW layout)."""
    def conv1x1(t, w, b):  # t: (B, Cin, N), w: (Cout, Cin), b: (Cout,)
        return jnp.einsum("oc,bcn->bon", w, t) + b[None, :, None]

    B, D, N = x_ncw.shape
    H = num_heads
    dim = D // H
    q = conv1x1(x_ncw, p["wq"], p["bq"]).reshape(B, dim, H, N)
    k = conv1x1(src_ncw, p["wk"], p["bk"]).reshape(B, dim, H, -1)
    v = conv1x1(src_ncw, p["wv"], p["bv"]).reshape(B, dim, H, -1)
    scores = jnp.einsum("bdhn,bdhm->bhnm", q, k) / (dim ** 0.5)
    prob = jax.nn.softmax(scores, axis=-1)
    msg = jnp.einsum("bhnm,bdhm->bdhn", prob, v).reshape(B, D, N)
    msg = conv1x1(msg, p["wm"], p["bm"])
    cat = jnp.concatenate([x_ncw, msg], axis=1)
    h1 = conv1x1(cat, p["w1"], p["b1"])
    mu = jnp.mean(h1, axis=-1, keepdims=True)
    var = jnp.mean((h1 - mu) ** 2, axis=-1, keepdims=True)
    h1 = jnp.maximum((h1 - mu) / jnp.sqrt(var + eps), 0.0)
    h2 = conv1x1(h1, p["w2"], p["b2"])
    return x_ncw + h2


def init_params(key, feature_dim):
    """Deterministic synthetic parameters with torch Conv1d-style shapes (out, in)."""
    D = feature_dim
    ks = jax.random.split(key, 12)

    def u(k, shape, fan_in):
        bound = 1.0 / (fan_in ** 0.5)
        return jax.random.uniform(k, shape, jnp.float32, -bound, bound)

    p = {
        "wq": u(ks[0], (D, D), D), "bq": u(ks[1], (D,), D),
        "wk": u(ks[2], (D, D), D), "bk": u(ks[3], (D,), D),
        "wv": u(ks[4], (D, D), D), "bv": u(ks[5], (D,), D),
        "wm": u(ks[6], (D, D), D), "bm": u(ks[7], (D,), D),
        "w1": u(ks[8], (2 * D, 2 * D), 2 * D), "b1": u(ks[9], (2 * D,), 2 * D),
        "w2": u(ks[10], (D, 2 * D), 2 * D),
        # torch.nn.init.constant_(self.mlp[-1].bias, 0.0)
        "b2": jnp.zeros((D,), jnp.float32),
    }
    return p


if __name__ == "__main__":
    key = jax.random.PRNGKey(0)
    B, D, N, M = 2, 32, 16, 8

    k_x, k_s, k_p = jax.random.split(key, 3)
    x = jax.random.normal(k_x, (B, D, N), jnp.float32)       # NCW, like torch Conv1d input
    source = jax.random.normal(k_s, (B, D, M), jnp.float32)  # NCW
    params = init_params(k_p, D)

    # 1) single-head (module default), exact f32 matmuls -> tight check
    out = jax.block_until_ready(
        feature_fuse(x, source, params, num_heads=1, matmul_dtype=jnp.float32))
    ref = feature_fuse_ref(x, source, params, num_heads=1)
    assert out.shape == (B, D, N)
    assert jnp.allclose(out, ref, atol=1e-4, rtol=1e-4), "f32 kernel mismatch vs reference"

    # 2) multi-head path (exercises the head-permutation folded into the weights)
    out2 = jax.block_until_ready(
        feature_fuse(x, source, params, num_heads=2, matmul_dtype=jnp.float32))
    ref2 = feature_fuse_ref(x, source, params, num_heads=2)
    assert jnp.allclose(out2, ref2, atol=1e-4, rtol=1e-4), "multi-head kernel mismatch"

    # 3) bf16 MXU operands (v6e/v7x fast path), f32 accumulation -> loose check
    out_bf16 = jax.block_until_ready(
        feature_fuse(x, source, params, num_heads=1, matmul_dtype=jnp.bfloat16))
    assert jnp.allclose(out_bf16, ref, atol=2e-1, rtol=2e-1), "bf16 kernel drifted too far"

    print("KERNEL_OK")
</pallas_src>

<mosaic_0001>
module attributes {stable_mosaic.version = 11 : i64} {
  func.func @_feature_fuse_kernel(%arg0: i32, %arg1: memref<2x32x16xf32, #tpu.memory_space<vmem>>, %arg2: memref<2x32x8xf32, #tpu.memory_space<vmem>>, %arg3: memref<32x32xf32, #tpu.memory_space<vmem>>, %arg4: memref<1x32xf32, #tpu.memory_space<vmem>>, %arg5: memref<32x64xf32, #tpu.memory_space<vmem>>, %arg6: memref<1x64xf32, #tpu.memory_space<vmem>>, %arg7: memref<32x32xf32, #tpu.memory_space<vmem>>, %arg8: memref<1x32xf32, #tpu.memory_space<vmem>>, %arg9: memref<32x64xf32, #tpu.memory_space<vmem>>, %arg10: memref<32x64xf32, #tpu.memory_space<vmem>>, %arg11: memref<1x64xf32, #tpu.memory_space<vmem>>, %arg12: memref<64x32xf32, #tpu.memory_space<vmem>>, %arg13: memref<1x32xf32, #tpu.memory_space<vmem>>, %arg14: memref<2x32x16xf32, #tpu.memory_space<vmem>>) attributes {dimension_semantics = [#tpu.dimension_semantics<parallel>], iteration_bounds = array<i64: 1>, scalar_prefetch = 0 : i64, scratch_operands = 0 : i64, tpu.core_type = #tpu.core_type<tc>, window_params = [{transform_indices = @transform_0, window_bounds = array<i64: 2, 32, 16>}, {transform_indices = @transform_1, window_bounds = array<i64: 2, 32, 8>}, {pipeline_mode = #tpu.pipeline_mode<synchronous>, transform_indices = @transform_2, window_bounds = array<i64: 32, 32>}, {pipeline_mode = #tpu.pipeline_mode<synchronous>, transform_indices = @transform_3, window_bounds = array<i64: 1, 32>}, {pipeline_mode = #tpu.pipeline_mode<synchronous>, transform_indices = @transform_4, window_bounds = array<i64: 32, 64>}, {pipeline_mode = #tpu.pipeline_mode<synchronous>, transform_indices = @transform_5, window_bounds = array<i64: 1, 64>}, {pipeline_mode = #tpu.pipeline_mode<synchronous>, transform_indices = @transform_6, window_bounds = array<i64: 32, 32>}, {pipeline_mode = #tpu.pipeline_mode<synchronous>, transform_indices = @transform_7, window_bounds = array<i64: 1, 32>}, {pipeline_mode = #tpu.pipeline_mode<synchronous>, transform_indices = @transform_8, window_bounds = array<i64: 32, 64>}, {pipeline_mode = #tpu.pipeline_mode<synchronous>, transform_indices = @transform_9, window_bounds = array<i64: 32, 64>}, {pipeline_mode = #tpu.pipeline_mode<synchronous>, transform_indices = @transform_10, window_bounds = array<i64: 1, 64>}, {pipeline_mode = #tpu.pipeline_mode<synchronous>, transform_indices = @transform_11, window_bounds = array<i64: 64, 32>}, {pipeline_mode = #tpu.pipeline_mode<synchronous>, transform_indices = @transform_12, window_bounds = array<i64: 1, 32>}, {transform_indices = @transform_13, window_bounds = array<i64: 2, 32, 16>}]} {
    %c0 = arith.constant 0 : index
    %c0_0 = arith.constant 0 : index
    %c0_1 = arith.constant 0 : index
    %0 = vector.load %arg1[%c0, %c0_0, %c0_1] : memref<2x32x16xf32, #tpu.memory_space<vmem>>, vector<2x32x16xf32>
    %1 = tpu.transpose %0, [0, 2, 1] : vector<2x32x16xf32> -> vector<2x16x32xf32>
    %2 = vector.shape_cast %1 : vector<2x16x32xf32> to vector<32x32xf32>
    %c0_2 = arith.constant 0 : index
    %c0_3 = arith.constant 0 : index
    %c0_4 = arith.constant 0 : index
    %3 = vector.load %arg2[%c0_2, %c0_3, %c0_4] : memref<2x32x8xf32, #tpu.memory_space<vmem>>, vector<2x32x8xf32>
    %4 = tpu.transpose %3, [0, 2, 1] : vector<2x32x8xf32> -> vector<2x8x32xf32>
    %5 = vector.shape_cast %4 : vector<2x8x32xf32> to vector<16x32xf32>
    %c0_5 = arith.constant 0 : index
    %c0_6 = arith.constant 0 : index
    %6 = vector.load %arg3[%c0_5, %c0_6] : memref<32x32xf32, #tpu.memory_space<vmem>>, vector<32x32xf32>
    %cst = arith.constant dense<0.000000e+00> : vector<32x32xf32>
    %7 = tpu.matmul %2, %6, %cst {dimension_numbers = #tpu.dot_dimension_numbers<[1], [0], [0], [1], [0, 0, 1, 1], [], []>} : vector<32x32xf32>, vector<32x32xf32>, vector<32x32xf32> -> vector<32x32xf32>
    %c0_7 = arith.constant 0 : index
    %c0_8 = arith.constant 0 : index
    %8 = vector.load %arg4[%c0_7, %c0_8] : memref<1x32xf32, #tpu.memory_space<vmem>>, vector<1x32xf32>
    %9 = vector.broadcast %8 : vector<1x32xf32> to vector<32x32xf32>
    %10 = arith.addf %7, %9 : vector<32x32xf32>
    %c0_9 = arith.constant 0 : index
    %c0_10 = arith.constant 0 : index
    %11 = vector.load %arg5[%c0_9, %c0_10] : memref<32x64xf32, #tpu.memory_space<vmem>>, vector<32x64xf32>
    %cst_11 = arith.constant dense<0.000000e+00> : vector<16x64xf32>
    %12 = tpu.matmul %5, %11, %cst_11 {dimension_numbers = #tpu.dot_dimension_numbers<[1], [0], [0], [1], [0, 0, 1, 1], [], []>} : vector<16x32xf32>, vector<32x64xf32>, vector<16x64xf32> -> vector<16x64xf32>
    %c0_12 = arith.constant 0 : index
    %c0_13 = arith.constant 0 : index
    %13 = vector.load %arg6[%c0_12, %c0_13] : memref<1x64xf32, #tpu.memory_space<vmem>>, vector<1x64xf32>
    %14 = vector.broadcast %13 : vector<1x64xf32> to vector<16x64xf32>
    %15 = arith.addf %12, %14 : vector<16x64xf32>
    %16 = vector.extract_strided_slice %15 {offsets = [0, 0], sizes = [16, 32], strides = [1, 1]} : vector<16x64xf32> to vector<16x32xf32>
    %17 = vector.extract_strided_slice %15 {offsets = [0, 32], sizes = [16, 32], strides = [1, 1]} : vector<16x64xf32> to vector<16x32xf32>
    %cst_14 = arith.constant 0.176776692 : f32
    %18 = vector.broadcast %cst_14 : f32 to vector<32x32xf32>
    %19 = arith.mulf %10, %18 : vector<32x32xf32>
    %20 = vector.shape_cast %19 : vector<32x32xf32> to vector<2x16x32xf32>
    %21 = vector.shape_cast %16 : vector<16x32xf32> to vector<2x8x32xf32>
    %22 = vector.shape_cast %17 : vector<16x32xf32> to vector<2x8x32xf32>
    "tpu.trace_start"() <{level = 10 : i32, message = "bnd,bmd->bnm"}> : () -> ()
    %cst_15 = arith.constant dense<0.000000e+00> : vector<2x16x8xf32>
    %23 = tpu.matmul %20, %21, %cst_15 {dimension_numbers = #tpu.dot_dimension_numbers<[2], [2], [1], [1], [0, 0, 0, 1, 1, 1], [0], [0]>} : vector<2x16x32xf32>, vector<2x8x32xf32>, vector<2x16x8xf32> -> vector<2x16x8xf32>
    "tpu.trace_stop"() : () -> ()
    %cst_16 = arith.constant dense<0xFF800000> : vector<2x16xf32>
    %24 = vector.multi_reduction <maximumf>, %23, %cst_16 [2] : vector<2x16x8xf32> to vector<2x16xf32>
    %25 = vector.shape_cast %24 : vector<2x16xf32> to vector<2x16x1xf32>
    %26 = vector.broadcast %25 : vector<2x16x1xf32> to vector<2x16x8xf32>
    %27 = arith.subf %23, %26 : vector<2x16x8xf32>
    %28 = math.exp %27 : vector<2x16x8xf32>
    %cst_17 = arith.constant dense<0.000000e+00> : vector<2x16xf32>
    %29 = vector.multi_reduction <add>, %28, %cst_17 [2] : vector<2x16x8xf32> to vector<2x16xf32>
    %30 = vector.shape_cast %29 : vector<2x16xf32> to vector<2x16x1xf32>
    %31 = tpu.reciprocal %30 : vector<2x16x1xf32> -> vector<2x16x1xf32>
    %32 = vector.broadcast %31 : vector<2x16x1xf32> to vector<2x16x8xf32>
    %33 = arith.mulf %28, %32 : vector<2x16x8xf32>
    "tpu.trace_start"() <{level = 10 : i32, message = "bnm,bmd->bnd"}> : () -> ()
    %cst_18 = arith.constant dense<0.000000e+00> : vector<2x16x32xf32>
    %34 = tpu.matmul %33, %22, %cst_18 {dimension_numbers = #tpu.dot_dimension_numbers<[2], [1], [1], [2], [0, 0, 0, 1, 1, 2], [0], [0]>} : vector<2x16x8xf32>, vector<2x8x32xf32>, vector<2x16x32xf32> -> vector<2x16x32xf32>
    "tpu.trace_stop"() : () -> ()
    %35 = vector.shape_cast %34 : vector<2x16x32xf32> to vector<32x32xf32>
    %c0_19 = arith.constant 0 : index
    %c0_20 = arith.constant 0 : index
    %36 = vector.load %arg7[%c0_19, %c0_20] : memref<32x32xf32, #tpu.memory_space<vmem>>, vector<32x32xf32>
    %cst_21 = arith.constant dense<0.000000e+00> : vector<32x32xf32>
    %37 = tpu.matmul %35, %36, %cst_21 {dimension_numbers = #tpu.dot_dimension_numbers<[1], [0], [0], [1], [0, 0, 1, 1], [], []>} : vector<32x32xf32>, vector<32x32xf32>, vector<32x32xf32> -> vector<32x32xf32>
    %c0_22 = arith.constant 0 : index
    %c0_23 = arith.constant 0 : index
    %38 = vector.load %arg8[%c0_22, %c0_23] : memref<1x32xf32, #tpu.memory_space<vmem>>, vector<1x32xf32>
    %39 = vector.broadcast %38 : vector<1x32xf32> to vector<32x32xf32>
    %40 = arith.addf %37, %39 : vector<32x32xf32>
    %c0_24 = arith.constant 0 : index
    %c0_25 = arith.constant 0 : index
    %41 = vector.load %arg9[%c0_24, %c0_25] : memref<32x64xf32, #tpu.memory_space<vmem>>, vector<32x64xf32>
    %cst_26 = arith.constant dense<0.000000e+00> : vector<32x64xf32>
    %42 = tpu.matmul %2, %41, %cst_26 {dimension_numbers = #tpu.dot_dimension_numbers<[1], [0], [0], [1], [0, 0, 1, 1], [], []>} : vector<32x32xf32>, vector<32x64xf32>, vector<32x64xf32> -> vector<32x64xf32>
    %c0_27 = arith.constant 0 : index
    %c0_28 = arith.constant 0 : index
    %43 = vector.load %arg10[%c0_27, %c0_28] : memref<32x64xf32, #tpu.memory_space<vmem>>, vector<32x64xf32>
    %cst_29 = arith.constant dense<0.000000e+00> : vector<32x64xf32>
    %44 = tpu.matmul %40, %43, %cst_29 {dimension_numbers = #tpu.dot_dimension_numbers<[1], [0], [0], [1], [0, 0, 1, 1], [], []>} : vector<32x32xf32>, vector<32x64xf32>, vector<32x64xf32> -> vector<32x64xf32>
    %45 = arith.addf %42, %44 : vector<32x64xf32>
    %c0_30 = arith.constant 0 : index
    %c0_31 = arith.constant 0 : index
    %46 = vector.load %arg11[%c0_30, %c0_31] : memref<1x64xf32, #tpu.memory_space<vmem>>, vector<1x64xf32>
    %47 = vector.broadcast %46 : vector<1x64xf32> to vector<32x64xf32>
    %48 = arith.addf %45, %47 : vector<32x64xf32>
    %49 = vector.shape_cast %48 : vector<32x64xf32> to vector<2x16x64xf32>
    %cst_32 = arith.constant dense<0.000000e+00> : vector<2x64xf32>
    %50 = vector.multi_reduction <add>, %49, %cst_32 [1] : vector<2x16x64xf32> to vector<2x64xf32>
    %51 = vector.shape_cast %50 : vector<2x64xf32> to vector<2x1x64xf32>
    %cst_33 = arith.constant 1.600000e+01 : f32
    %52 = vector.broadcast %cst_33 : f32 to vector<2x1x64xf32>
    %53 = arith.divf %51, %52 : vector<2x1x64xf32>
    %54 = vector.broadcast %53 : vector<2x1x64xf32> to vector<2x16x64xf32>
    %55 = arith.subf %49, %54 : vector<2x16x64xf32>
    %56 = arith.mulf %55, %55 : vector<2x16x64xf32>
    %cst_34 = arith.constant dense<0.000000e+00> : vector<2x64xf32>
    %57 = vector.multi_reduction <add>, %56, %cst_34 [1] : vector<2x16x64xf32> to vector<2x64xf32>
    %58 = vector.shape_cast %57 : vector<2x64xf32> to vector<2x1x64xf32>
    %cst_35 = arith.constant 1.600000e+01 : f32
    %59 = vector.broadcast %cst_35 : f32 to vector<2x1x64xf32>
    %60 = arith.divf %58, %59 : vector<2x1x64xf32>
    %61 = vector.broadcast %53 : vector<2x1x64xf32> to vector<2x16x64xf32>
    %62 = arith.subf %49, %61 : vector<2x16x64xf32>
    %cst_36 = arith.constant 9.99999974E-6 : f32
    %63 = vector.broadcast %cst_36 : f32 to vector<2x1x64xf32>
    %64 = arith.addf %60, %63 : vector<2x1x64xf32>
    %65 = math.rsqrt %64 : vector<2x1x64xf32>
    %66 = vector.broadcast %65 : vector<2x1x64xf32> to vector<2x16x64xf32>
    %67 = arith.mulf %62, %66 : vector<2x16x64xf32>
    %cst_37 = arith.constant 0.000000e+00 : f32
    %68 = vector.broadcast %cst_37 : f32 to vector<2x16x64xf32>
    %69 = arith.maximumf %67, %68 : vector<2x16x64xf32>
    %70 = vector.shape_cast %69 : vector<2x16x64xf32> to vector<32x64xf32>
    %c0_38 = arith.constant 0 : index
    %c0_39 = arith.constant 0 : index
    %71 = vector.load %arg12[%c0_38, %c0_39] : memref<64x32xf32, #tpu.memory_space<vmem>>, vector<64x32xf32>
    %cst_40 = arith.constant dense<0.000000e+00> : vector<32x32xf32>
    %72 = tpu.matmul %70, %71, %cst_40 {dimension_numbers = #tpu.dot_dimension_numbers<[1], [0], [0], [1], [0, 0, 1, 1], [], []>} : vector<32x64xf32>, vector<64x32xf32>, vector<32x32xf32> -> vector<32x32xf32>
    %c0_41 = arith.constant 0 : index
    %c0_42 = arith.constant 0 : index
    %73 = vector.load %arg13[%c0_41, %c0_42] : memref<1x32xf32, #tpu.memory_space<vmem>>, vector<1x32xf32>
    %74 = vector.broadcast %73 : vector<1x32xf32> to vector<32x32xf32>
    %75 = arith.addf %72, %74 : vector<32x32xf32>
    %76 = vector.shape_cast %75 : vector<32x32xf32> to vector<2x16x32xf32>
    %77 = tpu.transpose %76, [0, 2, 1] : vector<2x16x32xf32> -> vector<2x32x16xf32>
    %78 = arith.addf %0, %77 : vector<2x32x16xf32>
    %c0_43 = arith.constant 0 : index
    %c0_44 = arith.constant 0 : index
    %c0_45 = arith.constant 0 : index
    %79 = vector.load %arg14[%c0_43, %c0_44, %c0_45] : memref<2x32x16xf32, #tpu.memory_space<vmem>>, vector<2x32x16xf32>
    tpu.vector_store %arg14[%c0_43, %c0_44, %c0_45], %78 {strides = array<i32>} : memref<2x32x16xf32, #tpu.memory_space<vmem>>, vector<2x32x16xf32>,
    return
  }
  func.func @transform_0(%arg0: i32) -> (i32, i32, i32) {
    %c0_i32 = arith.constant 0 : i32
    %c0_i32_0 = arith.constant 0 : i32
    %c0_i32_1 = arith.constant 0 : i32
    return %arg0, %c0_i32, %c0_i32_0 : i32, i32, i32
  }
  func.func @transform_1(%arg0: i32) -> (i32, i32, i32) {
    %c0_i32 = arith.constant 0 : i32
    %c0_i32_0 = arith.constant 0 : i32
    %c0_i32_1 = arith.constant 0 : i32
    return %arg0, %c0_i32, %c0_i32_0 : i32, i32, i32
  }
  func.func @transform_2(%arg0: i32) -> (i32, i32) {
    %c0_i32 = arith.constant 0 : i32
    %c0_i32_0 = arith.constant 0 : i32
    %c0_i32_1 = arith.constant 0 : i32
    return %c0_i32, %c0_i32_0 : i32, i32
  }
  func.func @transform_3(%arg0: i32) -> (i32, i32) {
    %c0_i32 = arith.constant 0 : i32
    %c0_i32_0 = arith.constant 0 : i32
    %c0_i32_1 = arith.constant 0 : i32
    return %c0_i32, %c0_i32_0 : i32, i32
  }
  func.func @transform_4(%arg0: i32) -> (i32, i32) {
    %c0_i32 = arith.constant 0 : i32
    %c0_i32_0 = arith.constant 0 : i32
    %c0_i32_1 = arith.constant 0 : i32
    return %c0_i32, %c0_i32_0 : i32, i32
  }
  func.func @transform_5(%arg0: i32) -> (i32, i32) {
    %c0_i32 = arith.constant 0 : i32
    %c0_i32_0 = arith.constant 0 : i32
    %c0_i32_1 = arith.constant 0 : i32
    return %c0_i32, %c0_i32_0 : i32, i32
  }
  func.func @transform_6(%arg0: i32) -> (i32, i32) {
    %c0_i32 = arith.constant 0 : i32
    %c0_i32_0 = arith.constant 0 : i32
    %c0_i32_1 = arith.constant 0 : i32
    return %c0_i32, %c0_i32_0 : i32, i32
  }
  func.func @transform_7(%arg0: i32) -> (i32, i32) {
    %c0_i32 = arith.constant 0 : i32
    %c0_i32_0 = arith.constant 0 : i32
    %c0_i32_1 = arith.constant 0 : i32
    return %c0_i32, %c0_i32_0 : i32, i32
  }
  func.func @transform_8(%arg0: i32) -> (i32, i32) {
    %c0_i32 = arith.constant 0 : i32
    %c0_i32_0 = arith.constant 0 : i32
    %c0_i32_1 = arith.constant 0 : i32
    return %c0_i32, %c0_i32_0 : i32, i32
  }
  func.func @transform_9(%arg0: i32) -> (i32, i32) {
    %c0_i32 = arith.constant 0 : i32
    %c0_i32_0 = arith.constant 0 : i32
    %c0_i32_1 = arith.constant 0 : i32
    return %c0_i32, %c0_i32_0 : i32, i32
  }
  func.func @transform_10(%arg0: i32) -> (i32, i32) {
    %c0_i32 = arith.constant 0 : i32
    %c0_i32_0 = arith.constant 0 : i32
    %c0_i32_1 = arith.constant 0 : i32
    return %c0_i32, %c0_i32_0 : i32, i32
  }
  func.func @transform_11(%arg0: i32) -> (i32, i32) {
    %c0_i32 = arith.constant 0 : i32
    %c0_i32_0 = arith.constant 0 : i32
    %c0_i32_1 = arith.constant 0 : i32
    return %c0_i32, %c0_i32_0 : i32, i32
  }
  func.func @transform_12(%arg0: i32) -> (i32, i32) {
    %c0_i32 = arith.constant 0 : i32
    %c0_i32_0 = arith.constant 0 : i32
    %c0_i32_1 = arith.constant 0 : i32
    return %c0_i32, %c0_i32_0 : i32, i32
  }
  func.func @transform_13(%arg0: i32) -> (i32, i32, i32) {
    %c0_i32 = arith.constant 0 : i32
    %c0_i32_0 = arith.constant 0 : i32
    %c0_i32_1 = arith.constant 0 : i32
    return %arg0, %c0_i32, %c0_i32_0 : i32, i32, i32
  }
}

</mosaic_0001>

<llo_original>
// kernel: tpu_custom_call.1
$region0: #{tpu_custom_call.1}
  #allocation0 [shape = 'u32[]', space=smem, size = 0x4, offset = 0x4, fixed_abs, tag = 'smem constant byte address 0x4 - core index']
  #allocation1 [shape = 'u32[144,128]{1,0:T(1,128)}', space=vmem, size = 0x12000, scoped, tag = 'internal scratch']
  %s0 = inlined_call_operand.hbm [shape: f32[2,32,16], index: 0, kind: input, shape index: {}]
  %s1 = inlined_call_operand.hbm [shape: f32[2,32,8], index: 1, kind: input, shape index: {}]
  %s2 = inlined_call_operand.hbm [shape: f32[32,32], index: 2, kind: input, shape index: {}]
  %s3 = inlined_call_operand.hbm [shape: f32[1,32], index: 3, kind: input, shape index: {}]
  %s4 = inlined_call_operand.hbm [shape: f32[32,64], index: 4, kind: input, shape index: {}]
  %s5 = inlined_call_operand.hbm [shape: f32[1,64], index: 5, kind: input, shape index: {}]
  %s6 = inlined_call_operand.hbm [shape: f32[32,32], index: 6, kind: input, shape index: {}]
  %s7 = inlined_call_operand.hbm [shape: f32[1,32], index: 7, kind: input, shape index: {}]
  %s8 = inlined_call_operand.hbm [shape: f32[32,64], index: 8, kind: input, shape index: {}]
  %s9 = inlined_call_operand.hbm [shape: f32[32,64], index: 9, kind: input, shape index: {}]
  %s10 = inlined_call_operand.hbm [shape: f32[1,64], index: 10, kind: input, shape index: {}]
  %s11 = inlined_call_operand.hbm [shape: f32[64,32], index: 11, kind: input, shape index: {}]
  %s12 = inlined_call_operand.hbm [shape: f32[1,32], index: 12, kind: input, shape index: {}]
  %s13 = inlined_call_operand.hbm [shape: f32[2,32,16], index: 13, kind: output, shape index: {}]
  %s14 = sld [smem:[#allocation0]]
  $region114: #{tpu_custom_call.1} parent=0
    _
  %s16 = ssub.s32 1, %s14
  %s17 = scalar_select 0, %s16, %s14
  $region1: #{tpu_custom_call.1} parent=0
    #allocation2 [shape = 'u8[32768]{0}', space=vmem, size = 0x8000, scoped, tag = 'input window, operand 0, single buffered']
    #allocation3 [shape = 's32[1]{0}', space=sflag, size = 0x4, scoped, tag = 'scoped memory for tpu_custom_call.1']
    #allocation4 [shape = 's32[1]{0}', space=sflag, size = 0x4, scoped, tag = 'scoped memory for tpu_custom_call.1']
    #allocation5 [shape = 'u8[32768]{0}', space=vmem, size = 0x8000, scoped, tag = 'input window, operand 1, single buffered']
    #allocation6 [shape = 's32[1]{0}', space=sflag, size = 0x4, scoped, tag = 'scoped memory for tpu_custom_call.1']
    #allocation7 [shape = 'u8[16384]{0}', space=vmem, size = 0x4000, scoped, tag = 'input window, operand 2, single buffered']
    #allocation8 [shape = 'u8[512]{0}', space=vmem, size = 0x400, scoped, tag = 'input window, operand 3, single buffered']
    #allocation9 [shape = 's32[1]{0}', space=sflag, size = 0x4, scoped, tag = 'scoped memory for tpu_custom_call.1']
    #allocation10 [shape = 'u8[16384]{0}', space=vmem, size = 0x4000, scoped, tag = 'input window, operand 4, single buffered']
    #allocation11 [shape = 'u8[512]{0}', space=vmem, size = 0x400, scoped, tag = 'input window, operand 5, single buffered']
    #allocation12 [shape = 's32[1]{0}', space=sflag, size = 0x4, scoped, tag = 'scoped memory for tpu_custom_call.1']
    #allocation13 [shape = 'u8[16384]{0}', space=vmem, size = 0x4000, scoped, tag = 'input window, operand 6, single buffered']
    #allocation14 [shape = 'u8[512]{0}', space=vmem, size = 0x400, scoped, tag = 'input window, operand 7, single buffered']
    #allocation15 [shape = 's32[1]{0}', space=sflag, size = 0x4, scoped, tag = 'scoped memory for tpu_custom_call.1']
    #allocation16 [shape = 'u8[16384]{0}', space=vmem, size = 0x4000, scoped, tag = 'input window, operand 8, single buffered']
    #allocation17 [shape = 'u8[16384]{0}', space=vmem, size = 0x4000, scoped, tag = 'input window, operand 9, single buffered']
    #allocation18 [shape = 's32[1]{0}', space=sflag, size = 0x4, scoped, tag = 'scoped memory for tpu_custom_call.1']
    #allocation19 [shape = 'u8[512]{0}', space=vmem, size = 0x400, scoped, tag = 'input window, operand 10, single buffered']
    #allocation20 [shape = 'u8[32768]{0}', space=vmem, size = 0x8000, scoped, tag = 'input window, operand 11, single buffered']
    #allocation21 [shape = 's32[1]{0}', space=sflag, size = 0x4, scoped, tag = 'scoped memory for tpu_custom_call.1']
    #allocation22 [shape = 'u8[512]{0}', space=vmem, size = 0x400, scoped, tag = 'input window, operand 12, single buffered']
    #allocation23 [shape = 'u8[32768]{0}', space=vmem, size = 0x8000, scoped, tag = 'output window, operand 0, single buffered']
    %18 = vsyncpa [#allocation3], 0
    %19 = vsyncpa [#allocation6], 0
    %20 = vsyncpa [#allocation9], 0
    %21 = vsyncpa [#allocation12], 0
    %22 = vsyncpa [#allocation15], 0
    %23 = vsyncpa [#allocation18], 0
    %24 = vsyncpa [#allocation21], 0
    %25 = vsyncpa [#allocation4], 0
    // Predicated region
    $region2: #{tpu_custom_call.1} parent=1 // pred_check
      _
    $region3: #{tpu_custom_call.1} parent=1 // pred_check_branch
      %27 = sbr.rel (0) target = $region5
    $region4: #{tpu_custom_call.1} parent=1 // pred_region
      %s29 = ssub.s32 1024, 1024
      %30 = vsyncadd [#allocation3], %s29
      %s31 = sshll.u32 [#allocation2], 4
      %s32 = int_to_ptr.vmem [resolvable:$true] %s31
      %37 = dma.hbm_to_vmem [thread:$0]  %s0, 1024, %s32, [#allocation3], 128, 128, 8
    $region5: #{tpu_custom_call.1} parent=1 // pred_fallthru
      _
    // Predicated region
    $region6: #{tpu_custom_call.1} parent=1 // pred_check
      _
    $region7: #{tpu_custom_call.1} parent=1 // pred_check_branch
      %39 = sbr.rel (0) target = $region9
    $region8: #{tpu_custom_call.1} parent=1 // pred_region
      %s41 = ssub.s32 1024, 1024
      %42 = vsyncadd [#allocation6], %s41
      %s43 = sshll.u32 [#allocation5], 4
      %s44 = int_to_ptr.vmem [resolvable:$true] %s43
      %49 = dma.hbm_to_vmem [thread:$0]  %s1, 1024, %s44, [#allocation6], 128, 128, 8
    $region9: #{tpu_custom_call.1} parent=1 // pred_fallthru
      _
    // Predicated region
    $region10: #{tpu_custom_call.1} parent=1 // pred_check
      _
    $region11: #{tpu_custom_call.1} parent=1 // pred_check_branch
      %51 = sbr.rel (0) target = $region13
    $region12: #{tpu_custom_call.1} parent=1 // pred_region
      %s53 = ssub.s32 512, 512
      %54 = vsyncadd [#allocation6], %s53
      %s55 = sshll.u32 [#allocation7], 4
      %s56 = int_to_ptr.vmem [resolvable:$true] %s55
      %61 = dma.hbm_to_vmem [thread:$0]  %s2, 512, %s56, [#allocation6], 128, 128, 8
    $region13: #{tpu_custom_call.1} parent=1 // pred_fallthru
      _
    // Predicated region
    $region14: #{tpu_custom_call.1} parent=1 // pred_check
      _
    $region15: #{tpu_custom_call.1} parent=1 // pred_check_branch
      %63 = sbr.rel (0) target = $region17
    $region16: #{tpu_custom_call.1} parent=1 // pred_region
      %s65 = ssub.s32 16, 16
      %66 = vsyncadd [#allocation9], %s65
      %s68 = sshll.u32 [#allocation8], 4
      %s69 = int_to_ptr.vmem [resolvable:$true] %s68
      %71 = dma.hbm_to_vmem [thread:$0]  %s3, 16, %s69, [#allocation9]
    $region17: #{tpu_custom_call.1} parent=1 // pred_fallthru
      _
    // Predicated region
    $region18: #{tpu_custom_call.1} parent=1 // pred_check
      _
    $region19: #{tpu_custom_call.1} parent=1 // pred_check_branch
      %73 = sbr.rel (0) target = $region21
    $region20: #{tpu_custom_call.1} parent=1 // pred_region
      %s75 = ssub.s32 512, 512
      %76 = vsyncadd [#allocation9], %s75
      %s77 = sshll.u32 [#allocation10], 4
      %s78 = int_to_ptr.vmem [resolvable:$true] %s77
      %83 = dma.hbm_to_vmem [thread:$0]  %s4, 512, %s78, [#allocation9], 128, 128, 8
    $region21: #{tpu_custom_call.1} parent=1 // pred_fallthru
      _
    // Predicated region
    $region22: #{tpu_custom_call.1} parent=1 // pred_check
      _
    $region23: #{tpu_custom_call.1} parent=1 // pred_check_branch
      %85 = sbr.rel (0) target = $region25
    $region24: #{tpu_custom_call.1} parent=1 // pred_region
      %s87 = ssub.s32 16, 16
      %88 = vsyncadd [#allocation12], %s87
      %s90 = sshll.u32 [#allocation11], 4
      %s91 = int_to_ptr.vmem [resolvable:$true] %s90
      %93 = dma.hbm_to_vmem [thread:$0]  %s5, 16, %s91, [#allocation12]
    $region25: #{tpu_custom_call.1} parent=1 // pred_fallthru
      _
    // Predicated region
    $region26: #{tpu_custom_call.1} parent=1 // pred_check
      _
    $region27: #{tpu_custom_call.1} parent=1 // pred_check_branch
      %95 = sbr.rel (0) target = $region29
    $region28: #{tpu_custom_call.1} parent=1 // pred_region
      %s97 = ssub.s32 512, 512
      %98 = vsyncadd [#allocation12], %s97
      %s99 = sshll.u32 [#allocation13], 4
      %s100 = int_to_ptr.vmem [resolvable:$true] %s99
      %105 = dma.hbm_to_vmem [thread:$0]  %s6, 512, %s100, [#allocation12], 128, 128, 8
    $region29: #{tpu_custom_call.1} parent=1 // pred_fallthru
      _
    // Predicated region
    $region30: #{tpu_custom_call.1} parent=1 // pred_check
      _
    $region31: #{tpu_custom_call.1} parent=1 // pred_check_branch
      %107 = sbr.rel (0) target = $region33
    $region32: #{tpu_custom_call.1} parent=1 // pred_region
      %s109 = ssub.s32 16, 16
      %110 = vsyncadd [#allocation15], %s109
      %s112 = sshll.u32 [#allocation14], 4
      %s113 = int_to_ptr.vmem [resolvable:$true] %s112
      %115 = dma.hbm_to_vmem [thread:$0]  %s7, 16, %s113, [#allocation15]
    $region33: #{tpu_custom_call.1} parent=1 // pred_fallthru
      _
    // Predicated region
    $region34: #{tpu_custom_call.1} parent=1 // pred_check
      _
    $region35: #{tpu_custom_call.1} parent=1 // pred_check_branch
      %117 = sbr.rel (0) target = $region37
    $region36: #{tpu_custom_call.1} parent=1 // pred_region
      %s119 = ssub.s32 512, 512
      %120 = vsyncadd [#allocation15], %s119
      %s121 = sshll.u32 [#allocation16], 4
      %s122 = int_to_ptr.vmem [resolvable:$true] %s121
      %127 = dma.hbm_to_vmem [thread:$0]  %s8, 512, %s122, [#allocation15], 128, 128, 8
    $region37: #{tpu_custom_call.1} parent=1 // pred_fallthru
      _
    // Predicated region
    $region38: #{tpu_custom_call.1} parent=1 // pred_check
      _
    $region39: #{tpu_custom_call.1} parent=1 // pred_check_branch
      %129 = sbr.rel (0) target = $region41
    $region40: #{tpu_custom_call.1} parent=1 // pred_region
      %s131 = ssub.s32 512, 512
      %132 = vsyncadd [#allocation18], %s131
      %s133 = sshll.u32 [#allocation17], 4
      %s134 = int_to_ptr.vmem [resolvable:$true] %s133
      %139 = dma.hbm_to_vmem [thread:$0]  %s9, 512, %s134, [#allocation18], 128, 128, 8
    $region41: #{tpu_custom_call.1} parent=1 // pred_fallthru
      _
    // Predicated region
    $region42: #{tpu_custom_call.1} parent=1 // pred_check
      _
    $region43: #{tpu_custom_call.1} parent=1 // pred_check_branch
      %141 = sbr.rel (0) target = $region45
    $region44: #{tpu_custom_call.1} parent=1 // pred_region
      %s143 = ssub.s32 16, 16
      %144 = vsyncadd [#allocation18], %s143
      %s146 = sshll.u32 [#allocation19], 4
      %s147 = int_to_ptr.vmem [resolvable:$true] %s146
      %149 = dma.hbm_to_vmem [thread:$0]  %s10, 16, %s147, [#allocation18]
    $region45: #{tpu_custom_call.1} parent=1 // pred_fallthru
      _
    // Predicated region
    $region46: #{tpu_custom_call.1} parent=1 // pred_check
      _
    $region47: #{tpu_custom_call.1} parent=1 // pred_check_branch
      %151 = sbr.rel (0) target = $region49
    $region48: #{tpu_custom_call.1} parent=1 // pred_region
      %s153 = ssub.s32 1024, 1024
      %154 = vsyncadd [#allocation21], %s153
      %s155 = sshll.u32 [#allocation20], 4
      %s156 = int_to_ptr.vmem [resolvable:$true] %s155
      %161 = dma.hbm_to_vmem [thread:$0]  %s11, 1024, %s156, [#allocation21], 128, 128, 8
    $region49: #{tpu_custom_call.1} parent=1 // pred_fallthru
      _
    // Predicated region
    $region50: #{tpu_custom_call.1} parent=1 // pred_check
      _
    $region51: #{tpu_custom_call.1} parent=1 // pred_check_branch
      %163 = sbr.rel (0) target = $region53
    $region52: #{tpu_custom_call.1} parent=1 // pred_region
      %s165 = ssub.s32 16, 16
      %166 = vsyncadd [#allocation21], %s165
      %s168 = sshll.u32 [#allocation22], 4
      %s169 = int_to_ptr.vmem [resolvable:$true] %s168
      %171 = dma.hbm_to_vmem [thread:$0]  %s12, 16, %s169, [#allocation21]
    $region53: #{tpu_custom_call.1} parent=1 // pred_fallthru
      _
    // Predicated region
    $region54: #{tpu_custom_call.1} parent=1 // pred_check
      _
    $region55: #{tpu_custom_call.1} parent=1 // pred_check_branch
      %173 = sbr.rel (0) target = $region57
    $region56: #{tpu_custom_call.1} parent=1 // pred_region
      %174 = dma.done [#allocation3], 1024
    $region57: #{tpu_custom_call.1} parent=1 // pred_fallthru
      _
    // Predicated region
    $region58: #{tpu_custom_call.1} parent=1 // pred_check
      _
    $region59: #{tpu_custom_call.1} parent=1 // pred_check_branch
      %176 = sbr.rel (0) target = $region61
    $region60: #{tpu_custom_call.1} parent=1 // pred_region
      %177 = dma.done [#allocation6], 1024
    $region61: #{tpu_custom_call.1} parent=1 // pred_fallthru
      _
    // Predicated region
    $region62: #{tpu_custom_call.1} parent=1 // pred_check
      _
    $region63: #{tpu_custom_call.1} parent=1 // pred_check_branch
      %179 = sbr.rel (0) target = $region65
    $region64: #{tpu_custom_call.1} parent=1 // pred_region
      %180 = dma.done [#allocation6], 512
    $region65: #{tpu_custom_call.1} parent=1 // pred_fallthru
      _
    // Predicated region
    $region66: #{tpu_custom_call.1} parent=1 // pred_check
      _
    $region67: #{tpu_custom_call.1} parent=1 // pred_check_branch
      %182 = sbr.rel (0) target = $region69
    $region68: #{tpu_custom_call.1} parent=1 // pred_region
      %183 = dma.done [#allocation9], 16
    $region69: #{tpu_custom_call.1} parent=1 // pred_fallthru
      _
    // Predicated region
    $region70: #{tpu_custom_call.1} parent=1 // pred_check
      _
    $region71: #{tpu_custom_call.1} parent=1 // pred_check_branch
      %185 = sbr.rel (0) target = $region73
    $region72: #{tpu_custom_call.1} parent=1 // pred_region
      %186 = dma.done [#allocation9], 512
    $region73: #{tpu_custom_call.1} parent=1 // pred_fallthru
      _
    // Predicated region
    $region74: #{tpu_custom_call.1} parent=1 // pred_check
      _
    $region75: #{tpu_custom_call.1} parent=1 // pred_check_branch
      %188 = sbr.rel (0) target = $region77
    $region76: #{tpu_custom_call.1} parent=1 // pred_region
      %189 = dma.done [#allocation12], 16
    $region77: #{tpu_custom_call.1} parent=1 // pred_fallthru
      _
    // Predicated region
    $region78: #{tpu_custom_call.1} parent=1 // pred_check
      _
    $region79: #{tpu_custom_call.1} parent=1 // pred_check_branch
      %191 = sbr.rel (0) target = $region81
    $region80: #{tpu_custom_call.1} parent=1 // pred_region
      %192 = dma.done [#allocation12], 512
    $region81: #{tpu_custom_call.1} parent=1 // pred_fallthru
      _
    // Predicated region
    $region82: #{tpu_custom_call.1} parent=1 // pred_check
      _
    $region83: #{tpu_custom_call.1} parent=1 // pred_check_branch
      %194 = sbr.rel (0) target = $region85
    $region84: #{tpu_custom_call.1} parent=1 // pred_region
      %195 = dma.done [#allocation15], 16
    $region85: #{tpu_custom_call.1} parent=1 // pred_fallthru
      _
    // Predicated region
    $region86: #{tpu_custom_call.1} parent=1 // pred_check
      _
    $region87: #{tpu_custom_call.1} parent=1 // pred_check_branch
      %197 = sbr.rel (0) target = $region89
    $region88: #{tpu_custom_call.1} parent=1 // pred_region
      %198 = dma.done [#allocation15], 512
    $region89: #{tpu_custom_call.1} parent=1 // pred_fallthru
      _
    // Predicated region
    $region90: #{tpu_custom_call.1} parent=1 // pred_check
      _
    $region91: #{tpu_custom_call.1} parent=1 // pred_check_branch
      %200 = sbr.rel (0) target = $region93
    $region92: #{tpu_custom_call.1} parent=1 // pred_region
      %201 = dma.done [#allocation18], 512
    $region93: #{tpu_custom_call.1} parent=1 // pred_fallthru
      _
    // Predicated region
    $region94: #{tpu_custom_call.1} parent=1 // pred_check
      _
    $region95: #{tpu_custom_call.1} parent=1 // pred_check_branch
      %203 = sbr.rel (0) target = $region97
    $region96: #{tpu_custom_call.1} parent=1 // pred_region
      %204 = dma.done [#allocation18], 16
    $region97: #{tpu_custom_call.1} parent=1 // pred_fallthru
      _
    // Predicated region
    $region98: #{tpu_custom_call.1} parent=1 // pred_check
      _
    $region99: #{tpu_custom_call.1} parent=1 // pred_check_branch
      %206 = sbr.rel (0) target = $region101
    $region100: #{tpu_custom_call.1} parent=1 // pred_region
      %207 = dma.done [#allocation21], 1024
    $region101: #{tpu_custom_call.1} parent=1 // pred_fallthru
      _
    // Predicated region
    $region102: #{tpu_custom_call.1} parent=1 // pred_check
      _
    $region103: #{tpu_custom_call.1} parent=1 // pred_check_branch
      %209 = sbr.rel (0) target = $region105
    $region104: #{tpu_custom_call.1} parent=1 // pred_region
      %210 = dma.done [#allocation21], 16
    $region105: #{tpu_custom_call.1} parent=1 // pred_fallthru
      _
    %v211 = vld [vmem:[#allocation2] sm:$0xff]
    %v212 = vld [vmem:[#allocation2 + $0x8] sm:$0xff]
    %v213 = vld [vmem:[#allocation2 + $0x10] sm:$0xff]
    %v214 = vld [vmem:[#allocation2 + $0x18] sm:$0xff]
    %v215 = vld [vmem:[#allocation2 + $0x20] sm:$0xff]
    %v216 = vld [vmem:[#allocation2 + $0x28] sm:$0xff]
    %v217 = vld [vmem:[#allocation2 + $0x30] sm:$0xff]
    %v218 = vld [vmem:[#allocation2 + $0x38] sm:$0xff]
    %219 = vxpose.xlu0.b32.start [1/16] %v211, 128
    %220 = vxpose.xlu0.b32.cont [2/16] %v212, 128
    %221 = vxpose.xlu0.b32.cont [3/16] %v213, 128
    %222 = vxpose.xlu0.b32.cont [4/16] %v214, 128
    %223 = vxpose.xlu0.b32.cont [5/16] 0.0, 128
    %224 = vxpose.xlu0.b32.cont [6/16] 0.0, 128
    %225 = vxpose.xlu0.b32.cont [7/16] 0.0, 128
    %226 = vxpose.xlu0.b32.cont [8/16] 0.0, 128
    %227 = vxpose.xlu0.b32.cont [9/16] 0.0, 128
    %228 = vxpose.xlu0.b32.cont [10/16] 0.0, 128
    %229 = vxpose.xlu0.b32.cont [11/16] 0.0, 128
    %230 = vxpose.xlu0.b32.cont [12/16] 0.0, 128
    %231 = vxpose.xlu0.b32.cont [13/16] 0.0, 128
    %232 = vxpose.xlu0.b32.cont [14/16] 0.0, 128
    %233 = vxpose.xlu0.b32.cont [15/16] 0.0, 128
    %234 = vxpose.xlu0.b32.end [16/16] 0.0, 128
    %v235 = vpop.trf.xlu0
    %v236 = vpop.trf.xlu0
    %v237 = vpop.trf.xlu0
    %v238 = vpop.trf.xlu0
    %v239 = vpop.trf.xlu0
    %v240 = vpop.trf.xlu0
    %v241 = vpop.trf.xlu0
    %v242 = vpop.trf.xlu0
    %v243 = vpop.trf.xlu0
    %v244 = vpop.trf.xlu0
    %v245 = vpop.trf.xlu0
    %v246 = vpop.trf.xlu0
    %v247 = vpop.trf.xlu0
    %v248 = vpop.trf.xlu0
    %v249 = vpop.trf.xlu0
    %v250 = vpop.trf.xlu0
    %251 = vxpose.xlu0.b32.start [1/16] %v215, 128
    %252 = vxpose.xlu0.b32.cont [2/16] %v216, 128
    %253 = vxpose.xlu0.b32.cont [3/16] %v217, 128
    %254 = vxpose.xlu0.b32.cont [4/16] %v218, 128
    %255 = vxpose.xlu0.b32.cont [5/16] 0.0, 128
    %256 = vxpose.xlu0.b32.cont [6/16] 0.0, 128
    %257 = vxpose.xlu0.b32.cont [7/16] 0.0, 128
    %258 = vxpose.xlu0.b32.cont [8/16] 0.0, 128
    %259 = vxpose.xlu0.b32.cont [9/16] 0.0, 128
    %260 = vxpose.xlu0.b32.cont [10/16] 0.0, 128
    %261 = vxpose.xlu0.b32.cont [11/16] 0.0, 128
    %262 = vxpose.xlu0.b32.cont [12/16] 0.0, 128
    %263 = vxpose.xlu0.b32.cont [13/16] 0.0, 128
    %264 = vxpose.xlu0.b32.cont [14/16] 0.0, 128
    %265 = vxpose.xlu0.b32.cont [15/16] 0.0, 128
    %266 = vxpose.xlu0.b32.end [16/16] 0.0, 128
    %v267 = vpop.trf.xlu0
    %v268 = vpop.trf.xlu0
    %v269 = vpop.trf.xlu0
    %v270 = vpop.trf.xlu0
    %v271 = vpop.trf.xlu0
    %v272 = vpop.trf.xlu0
    %v273 = vpop.trf.xlu0
    %v274 = vpop.trf.xlu0
    %v275 = vpop.trf.xlu0
    %v276 = vpop.trf.xlu0
    %v277 = vpop.trf.xlu0
    %v278 = vpop.trf.xlu0
    %v279 = vpop.trf.xlu0
    %v280 = vpop.trf.xlu0
    %v281 = vpop.trf.xlu0
    %v282 = vpop.trf.xlu0
    %v283 = vld [vmem:[#allocation5] sm:$0xff]
    %v284 = vld [vmem:[#allocation5 + $0x8] sm:$0xff]
    %v285 = vld [vmem:[#allocation5 + $0x10] sm:$0xff]
    %v286 = vld [vmem:[#allocation5 + $0x18] sm:$0xff]
    %v287 = vld [vmem:[#allocation5 + $0x20] sm:$0xff]
    %v288 = vld [vmem:[#allocation5 + $0x28] sm:$0xff]
    %v289 = vld [vmem:[#allocation5 + $0x30] sm:$0xff]
    %v290 = vld [vmem:[#allocation5 + $0x38] sm:$0xff]
    %291 = vxpose.xlu0.b32.start [1/16] %v283, 128
    %292 = vxpose.xlu0.b32.cont [2/16] %v284, 128
    %293 = vxpose.xlu0.b32.cont [3/16] %v285, 128
    %294 = vxpose.xlu0.b32.cont [4/16] %v286, 128
    %295 = vxpose.xlu0.b32.cont [5/16] 0.0, 128
    %296 = vxpose.xlu0.b32.cont [6/16] 0.0, 128
    %297 = vxpose.xlu0.b32.cont [7/16] 0.0, 128
    %298 = vxpose.xlu0.b32.cont [8/16] 0.0, 128
    %299 = vxpose.xlu0.b32.cont [9/16] 0.0, 128
    %300 = vxpose.xlu0.b32.cont [10/16] 0.0, 128
    %301 = vxpose.xlu0.b32.cont [11/16] 0.0, 128
    %302 = vxpose.xlu0.b32.cont [12/16] 0.0, 128
    %303 = vxpose.xlu0.b32.cont [13/16] 0.0, 128
    %304 = vxpose.xlu0.b32.cont [14/16] 0.0, 128
    %305 = vxpose.xlu0.b32.cont [15/16] 0.0, 128
    %306 = vxpose.xlu0.b32.end [16/16] 0.0, 128
    %v307 = vpop.trf.xlu0
    %v308 = vpop.trf.xlu0
    %v309 = vpop.trf.xlu0
    %v310 = vpop.trf.xlu0
    %v311 = vpop.trf.xlu0
    %v312 = vpop.trf.xlu0
    %v313 = vpop.trf.xlu0
    %v314 = vpop.trf.xlu0
    %v315 = vpop.trf.xlu0
    %v316 = vpop.trf.xlu0
    %v317 = vpop.trf.xlu0
    %v318 = vpop.trf.xlu0
    %v319 = vpop.trf.xlu0
    %v320 = vpop.trf.xlu0
    %v321 = vpop.trf.xlu0
    %v322 = vpop.trf.xlu0
    %323 = vxpose.xlu0.b32.start [1/16] %v287, 128
    %324 = vxpose.xlu0.b32.cont [2/16] %v288, 128
    %325 = vxpose.xlu0.b32.cont [3/16] %v289, 128
    %326 = vxpose.xlu0.b32.cont [4/16] %v290, 128
    %327 = vxpose.xlu0.b32.cont [5/16] 0.0, 128
    %328 = vxpose.xlu0.b32.cont [6/16] 0.0, 128
    %329 = vxpose.xlu0.b32.cont [7/16] 0.0, 128
    %330 = vxpose.xlu0.b32.cont [8/16] 0.0, 128
    %331 = vxpose.xlu0.b32.cont [9/16] 0.0, 128
    %332 = vxpose.xlu0.b32.cont [10/16] 0.0, 128
    %333 = vxpose.xlu0.b32.cont [11/16] 0.0, 128
    %334 = vxpose.xlu0.b32.cont [12/16] 0.0, 128
    %335 = vxpose.xlu0.b32.cont [13/16] 0.0, 128
    %336 = vxpose.xlu0.b32.cont [14/16] 0.0, 128
    %337 = vxpose.xlu0.b32.cont [15/16] 0.0, 128
    %338 = vxpose.xlu0.b32.end [16/16] 0.0, 128
    %v339 = vpop.trf.xlu0
    %v340 = vpop.trf.xlu0
    %v341 = vpop.trf.xlu0
    %v342 = vpop.trf.xlu0
    %v343 = vpop.trf.xlu0
    %v344 = vpop.trf.xlu0
    %v345 = vpop.trf.xlu0
    %v346 = vpop.trf.xlu0
    %v347 = vpop.trf.xlu0
    %v348 = vpop.trf.xlu0
    %v349 = vpop.trf.xlu0
    %v350 = vpop.trf.xlu0
    %v351 = vpop.trf.xlu0
    %v352 = vpop.trf.xlu0
    %v353 = vpop.trf.xlu0
    %v354 = vpop.trf.xlu0
    %v355 = vld [vmem:[#allocation7] sm:$0xff]
    %v356 = vld [vmem:[#allocation7 + $0x8] sm:$0xff]
    %v357 = vld [vmem:[#allocation7 + $0x10] sm:$0xff]
    %v358 = vld [vmem:[#allocation7 + $0x18] sm:$0xff]
    %v359 = vld [vmem:[#allocation8] sm:$0x1]
    %v361 = vlaneseq
    %v362 = vshrl.u32 %v361, 7
    %v363 = vsub.s32 0, %v362
    %v364 = vrot.slane %v359, %v363
    %vm366 = vcmask 261120
    %v368 = vsel %vm366, %v235, 0
    %v371 = vsel %vm366, %v236, 0
    %v374 = vsel %vm366, %v267, 0
    %v377 = vsel %vm366, %v268, 0
    %379 = vmatprep.subr.mxu0 0.0
    %380 = vmatpush1.msra.mxu0 %v355
    %381 = vmatprep.subr.mxu0 0.0
    %382 = vmatpush1.msra.mxu0 %v356
    %383 = vmatprep.subr.mxu0 0.0
    %384 = vmatpush1.msra.mxu0 %v357
    %385 = vmatprep.subr.mxu0 0.0
    %386 = vmatpush1.msra.mxu0 %v358
    %387 = vmatprep.subr.mxu0 0.0
    %388 = vmatpush1.msra.mxu0 0.0
    %389 = vmatprep.subr.mxu0 0.0
    %390 = vmatpush1.msra.mxu0 0.0
    %391 = vmatprep.subr.mxu0 0.0
    %392 = vmatpush1.msra.mxu0 0.0
    %393 = vmatprep.subr.mxu0 0.0
    %394 = vmatpush1.msra.mxu0 0.0
    %395 = vmatprep.subr.mxu0 0.0
    %396 = vmatpush1.msra.mxu0 0.0
    %397 = vmatprep.subr.mxu0 0.0
    %398 = vmatpush1.msra.mxu0 0.0
    %399 = vmatprep.subr.mxu0 0.0
    %400 = vmatpush1.msra.mxu0 0.0
    %401 = vmatprep.subr.mxu0 0.0
    %402 = vmatpush1.msra.mxu0 0.0
    %403 = vmatprep.subr.mxu0 0.0
    %404 = vmatpush1.msra.mxu0 0.0
    %405 = vmatprep.subr.mxu0 0.0
    %406 = vmatpush1.msra.mxu0 0.0
    %407 = vmatprep.subr.mxu0 0.0
    %408 = vmatpush1.msra.mxu0 0.0
    %409 = vmatprep.subr.mxu0 0.0
    %410 = vmatpush1.msra.mxu0 0.0
    %411 = vmatprep.subr.mxu0 0.0
    %412 = vmatpush1.msra.mxu0 0.0
    %413 = vmatprep.subr.mxu0 0.0
    %414 = vmatpush1.msra.mxu0 0.0
    %415 = vmatprep.subr.mxu0 0.0
    %416 = vmatpush1.msra.mxu0 0.0
    %417 = vmatprep.subr.mxu0 0.0
    %418 = vmatpush1.msra.mxu0 0.0
    %419 = vmatprep.subr.mxu0 0.0
    %420 = vmatpush1.msra.mxu0 0.0
    %421 = vmatprep.subr.mxu0 0.0
    %422 = vmatpush1.msra.mxu0 0.0
    %423 = vmatprep.subr.mxu0 0.0
    %424 = vmatpush1.msra.mxu0 0.0
    %425 = vmatprep.subr.mxu0 0.0
    %426 = vmatpush1.msra.mxu0 0.0
    %427 = vmatprep.subr.mxu0 0.0
    %428 = vmatpush1.msra.mxu0 0.0
    %429 = vmatprep.subr.mxu0 0.0
    %430 = vmatpush1.msra.mxu0 0.0
    %431 = vmatprep.subr.mxu0 0.0
    %432 = vmatpush1.msra.mxu0 0.0
    %433 = vmatprep.subr.mxu0 0.0
    %434 = vmatpush1.msra.mxu0 0.0
    %435 = vmatprep.subr.mxu0 0.0
    %436 = vmatpush1.msra.mxu0 0.0
    %437 = vmatprep.subr.mxu0 0.0
    %438 = vmatpush1.msra.mxu0 0.0
    %439 = vmatprep.subr.mxu0 0.0
    %440 = vmatpush1.msra.mxu0 0.0
    %441 = vmatprep.subr.mxu0 0.0
    %442 = vmatpush1.msra.mxu0 0.0
    %443 = vmatprep.mubr.f32.mxu0 0.0
    %444 = vmatmul.mubr.f32.gmra.mrb[0].mxu0 %v368
    %v445 = vpop.f32.mrb[0].mxu0
    %v446 = vadd.f32 %v364, %v445
    %v447 = vpop.f32.mrb[0].mxu0
    %448 = vmatprep.mubr.f32.mxu0 0.0
    %449 = vmatmul.mubr.f32.gmra.mrb[0].mxu0 %v371
    %v450 = vpop.f32.mrb[0].mxu0
    %v451 = vadd.f32 %v364, %v450
    %v452 = vpop.f32.mrb[0].mxu0
    %453 = vmatprep.mubr.f32.mxu0 0.0
    %454 = vmatmul.mubr.f32.gmra.mrb[0].mxu0 %v374
    %v455 = vpop.f32.mrb[0].mxu0
    %v456 = vadd.f32 %v364, %v455
    %v457 = vpop.f32.mrb[0].mxu0
    %458 = vmatprep.mubr.f32.mxu0 0.0
    %459 = vmatmul.mubr.f32.gmra.mrb[0].mxu0 %v377
    %v460 = vpop.f32.mrb[0].mxu0
    %v461 = vadd.f32 %v364, %v460
    %v462 = vpop.f32.mrb[0].mxu0
    %463 = vdwg.mxu0
    %v464 = vld [vmem:[#allocation10] sm:$0xff]
    %v465 = vld [vmem:[#allocation10 + $0x8] sm:$0xff]
    %v466 = vld [vmem:[#allocation10 + $0x10] sm:$0xff]
    %v467 = vld [vmem:[#allocation10 + $0x18] sm:$0xff]
    %v468 = vld [vmem:[#allocation11] sm:$0x1]
    %v470 = vlaneseq
    %v471 = vshrl.u32 %v470, 7
    %v472 = vsub.s32 0, %v471
    %v473 = vrot.slane %v468, %v472
    %v476 = vsel %vm366, %v307, 0
    %v479 = vsel %vm366, %v339, 0
    %481 = vmatprep.subr.mxu0 0.0
    %482 = vmatpush1.msra.mxu0 %v464
    %483 = vmatprep.subr.mxu0 0.0
    %484 = vmatpush1.msra.mxu0 %v465
    %485 = vmatprep.subr.mxu0 0.0
    %486 = vmatpush1.msra.mxu0 %v466
    %487 = vmatprep.subr.mxu0 0.0
    %488 = vmatpush1.msra.mxu0 %v467
    %489 = vmatprep.subr.mxu0 0.0
    %490 = vmatpush1.msra.mxu0 0.0
    %491 = vmatprep.subr.mxu0 0.0
    %492 = vmatpush1.msra.mxu0 0.0
    %493 = vmatprep.subr.mxu0 0.0
    %494 = vmatpush1.msra.mxu0 0.0
    %495 = vmatprep.subr.mxu0 0.0
    %496 = vmatpush1.msra.mxu0 0.0
    %497 = vmatprep.subr.mxu0 0.0
    %498 = vmatpush1.msra.mxu0 0.0
    %499 = vmatprep.subr.mxu0 0.0
    %500 = vmatpush1.msra.mxu0 0.0
    %501 = vmatprep.subr.mxu0 0.0
    %502 = vmatpush1.msra.mxu0 0.0
    %503 = vmatprep.subr.mxu0 0.0
    %504 = vmatpush1.msra.mxu0 0.0
    %505 = vmatprep.subr.mxu0 0.0
    %506 = vmatpush1.msra.mxu0 0.0
    %507 = vmatprep.subr.mxu0 0.0
    %508 = vmatpush1.msra.mxu0 0.0
    %509 = vmatprep.subr.mxu0 0.0
    %510 = vmatpush1.msra.mxu0 0.0
    %511 = vmatprep.subr.mxu0 0.0
    %512 = vmatpush1.msra.mxu0 0.0
    %513 = vmatprep.subr.mxu0 0.0
    %514 = vmatpush1.msra.mxu0 0.0
    %515 = vmatprep.subr.mxu0 0.0
    %516 = vmatpush1.msra.mxu0 0.0
    %517 = vmatprep.subr.mxu0 0.0
    %518 = vmatpush1.msra.mxu0 0.0
    %519 = vmatprep.subr.mxu0 0.0
    %520 = vmatpush1.msra.mxu0 0.0
    %521 = vmatprep.subr.mxu0 0.0
    %522 = vmatpush1.msra.mxu0 0.0
    %523 = vmatprep.subr.mxu0 0.0
    %524 = vmatpush1.msra.mxu0 0.0
    %525 = vmatprep.subr.mxu0 0.0
    %526 = vmatpush1.msra.mxu0 0.0
    %527 = vmatprep.subr.mxu0 0.0
    %528 = vmatpush1.msra.mxu0 0.0
    %529 = vmatprep.subr.mxu0 0.0
    %530 = vmatpush1.msra.mxu0 0.0
    %531 = vmatprep.subr.mxu0 0.0
    %532 = vmatpush1.msra.mxu0 0.0
    %533 = vmatprep.subr.mxu0 0.0
    %534 = vmatpush1.msra.mxu0 0.0
    %535 = vmatprep.subr.mxu0 0.0
    %536 = vmatpush1.msra.mxu0 0.0
    %537 = vmatprep.subr.mxu0 0.0
    %538 = vmatpush1.msra.mxu0 0.0
    %539 = vmatprep.subr.mxu0 0.0
    %540 = vmatpush1.msra.mxu0 0.0
    %541 = vmatprep.subr.mxu0 0.0
    %542 = vmatpush1.msra.mxu0 0.0
    %543 = vmatprep.subr.mxu0 0.0
    %544 = vmatpush1.msra.mxu0 0.0
    %545 = vmatprep.mubr.f32.mxu0 0.0
    %546 = vmatmul.mubr.f32.gmra.mrb[0].mxu0 %v476
    %v547 = vpop.f32.mrb[0].mxu0
    %v548 = vadd.f32 %v473, %v547
    %v549 = vpop.f32.mrb[0].mxu0
    %550 = vmatprep.mubr.f32.mxu0 0.0
    %551 = vmatmul.mubr.f32.gmra.mrb[0].mxu0 %v479
    %v552 = vpop.f32.mrb[0].mxu0
    %v553 = vadd.f32 %v473, %v552
    %v554 = vpop.f32.mrb[0].mxu0
    %555 = vdwg.mxu0
    %v556 = vmul.f32 %v446, 0.17677669
    %v557 = vmul.f32 %v451, 0.17677669
    %v558 = vmul.f32 %v456, 0.17677669
    %v559 = vmul.f32 %v461, 0.17677669
    %v561 = vsel %vm366, %v556, 0
    %v564 = vsel %vm366, %v557, 0
    %v567 = vsel %vm366, %v548, 0
    %569 = vmatprep.subr.mxu0 0.0
    %570 = vmatpush1.xpose.msra.mxu0 %v567
    %571 = vmatprep.subr.mxu0 0.0
    %572 = vmatpush1.xpose.msra.mxu0 0.0
    %573 = vmatprep.subr.mxu0 0.0
    %574 = vmatpush1.xpose.msra.mxu0 0.0
    %575 = vmatprep.subr.mxu0 0.0
    %576 = vmatpush1.xpose.msra.mxu0 0.0
    %577 = vmatprep.subr.mxu0 0.0
    %578 = vmatpush1.xpose.msra.mxu0 0.0
    %579 = vmatprep.subr.mxu0 0.0
    %580 = vmatpush1.xpose.msra.mxu0 0.0
    %581 = vmatprep.subr.mxu0 0.0
    %582 = vmatpush1.xpose.msra.mxu0 0.0
    %583 = vmatprep.subr.mxu0 0.0
    %584 = vmatpush1.xpose.msra.mxu0 0.0
    %585 = vmatprep.subr.mxu0 0.0
    %586 = vmatpush1.xpose.msra.mxu0 0.0
    %587 = vmatprep.subr.mxu0 0.0
    %588 = vmatpush1.xpose.msra.mxu0 0.0
    %589 = vmatprep.subr.mxu0 0.0
    %590 = vmatpush1.xpose.msra.mxu0 0.0
    %591 = vmatprep.subr.mxu0 0.0
    %592 = vmatpush1.xpose.msra.mxu0 0.0
    %593 = vmatprep.subr.mxu0 0.0
    %594 = vmatpush1.xpose.msra.mxu0 0.0
    %595 = vmatprep.subr.mxu0 0.0
    %596 = vmatpush1.xpose.msra.mxu0 0.0
    %597 = vmatprep.subr.mxu0 0.0
    %598 = vmatpush1.xpose.msra.mxu0 0.0
    %599 = vmatprep.subr.mxu0 0.0
    %600 = vmatpush1.xpose.msra.mxu0 0.0
    %601 = vmatprep.subr.mxu0 0.0
    %602 = vmatpush1.xpose.msra.mxu0 0.0
    %603 = vmatprep.subr.mxu0 0.0
    %604 = vmatpush1.xpose.msra.mxu0 0.0
    %605 = vmatprep.subr.mxu0 0.0
    %606 = vmatpush1.xpose.msra.mxu0 0.0
    %607 = vmatprep.subr.mxu0 0.0
    %608 = vmatpush1.xpose.msra.mxu0 0.0
    %609 = vmatprep.subr.mxu0 0.0
    %610 = vmatpush1.xpose.msra.mxu0 0.0
    %611 = vmatprep.subr.mxu0 0.0
    %612 = vmatpush1.xpose.msra.mxu0 0.0
    %613 = vmatprep.subr.mxu0 0.0
    %614 = vmatpush1.xpose.msra.mxu0 0.0
    %615 = vmatprep.subr.mxu0 0.0
    %616 = vmatpush1.xpose.msra.mxu0 0.0
    %617 = vmatprep.subr.mxu0 0.0
    %618 = vmatpush1.xpose.msra.mxu0 0.0
    %619 = vmatprep.subr.mxu0 0.0
    %620 = vmatpush1.xpose.msra.mxu0 0.0
    %621 = vmatprep.subr.mxu0 0.0
    %622 = vmatpush1.xpose.msra.mxu0 0.0
    %623 = vmatprep.subr.mxu0 0.0
    %624 = vmatpush1.xpose.msra.mxu0 0.0
    %625 = vmatprep.subr.mxu0 0.0
    %626 = vmatpush1.xpose.msra.mxu0 0.0
    %627 = vmatprep.subr.mxu0 0.0
    %628 = vmatpush1.xpose.msra.mxu0 0.0
    %629 = vmatprep.subr.mxu0 0.0
    %630 = vmatpush1.xpose.msra.mxu0 0.0
    %631 = vmatprep.subr.mxu0 0.0
    %632 = vmatpush1.xpose.msra.mxu0 0.0
    %633 = vmatprep.mubr.f32.mxu0 0.0
    %634 = vmatmul.mubr.f32.gmra.mrb[0].mxu0 %v561
    %v635 = vpop.f32.mrb[0].mxu0
    %v636 = vadd.f32 0.0, %v635
    %v637 = vpop.f32.mrb[0].mxu0
    %638 = vmatprep.mubr.f32.mxu0 0.0
    %639 = vmatmul.mubr.f32.gmra.mrb[0].mxu0 %v564
    %v640 = vpop.f32.mrb[0].mxu0
    %v641 = vadd.f32 0.0, %v640
    %v642 = vpop.f32.mrb[0].mxu0
    %643 = vdwg.mxu0
    %v645 = vsel %vm366, %v558, 0
    %v648 = vsel %vm366, %v559, 0
    %v651 = vsel %vm366, %v553, 0
    %653 = vmatprep.subr.mxu0 0.0
    %654 = vmatpush1.xpose.msra.mxu0 %v651
    %655 = vmatprep.subr.mxu0 0.0
    %656 = vmatpush1.xpose.msra.mxu0 0.0
    %657 = vmatprep.subr.mxu0 0.0
    %658 = vmatpush1.xpose.msra.mxu0 0.0
    %659 = vmatprep.subr.mxu0 0.0
    %660 = vmatpush1.xpose.msra.mxu0 0.0
    %661 = vmatprep.subr.mxu0 0.0
    %662 = vmatpush1.xpose.msra.mxu0 0.0
    %663 = vmatprep.subr.mxu0 0.0
    %664 = vmatpush1.xpose.msra.mxu0 0.0
    %665 = vmatprep.subr.mxu0 0.0
    %666 = vmatpush1.xpose.msra.mxu0 0.0
    %667 = vmatprep.subr.mxu0 0.0
    %668 = vmatpush1.xpose.msra.mxu0 0.0
    %669 = vmatprep.subr.mxu0 0.0
    %670 = vmatpush1.xpose.msra.mxu0 0.0
    %671 = vmatprep.subr.mxu0 0.0
    %672 = vmatpush1.xpose.msra.mxu0 0.0
    %673 = vmatprep.subr.mxu0 0.0
    %674 = vmatpush1.xpose.msra.mxu0 0.0
    %675 = vmatprep.subr.mxu0 0.0
    %676 = vmatpush1.xpose.msra.mxu0 0.0
    %677 = vmatprep.subr.mxu0 0.0
    %678 = vmatpush1.xpose.msra.mxu0 0.0
    %679 = vmatprep.subr.mxu0 0.0
    %680 = vmatpush1.xpose.msra.mxu0 0.0
    %681 = vmatprep.subr.mxu0 0.0
    %682 = vmatpush1.xpose.msra.mxu0 0.0
    %683 = vmatprep.subr.mxu0 0.0
    %684 = vmatpush1.xpose.msra.mxu0 0.0
    %685 = vmatprep.subr.mxu0 0.0
    %686 = vmatpush1.xpose.msra.mxu0 0.0
    %687 = vmatprep.subr.mxu0 0.0
    %688 = vmatpush1.xpose.msra.mxu0 0.0
    %689 = vmatprep.subr.mxu0 0.0
    %690 = vmatpush1.xpose.msra.mxu0 0.0
    %691 = vmatprep.subr.mxu0 0.0
    %692 = vmatpush1.xpose.msra.mxu0 0.0
    %693 = vmatprep.subr.mxu0 0.0
    %694 = vmatpush1.xpose.msra.mxu0 0.0
    %695 = vmatprep.subr.mxu0 0.0
    %696 = vmatpush1.xpose.msra.mxu0 0.0
    %697 = vmatprep.subr.mxu0 0.0
    %698 = vmatpush1.xpose.msra.mxu0 0.0
    %699 = vmatprep.subr.mxu0 0.0
    %700 = vmatpush1.xpose.msra.mxu0 0.0
    %701 = vmatprep.subr.mxu0 0.0
    %702 = vmatpush1.xpose.msra.mxu0 0.0
    %703 = vmatprep.subr.mxu0 0.0
    %704 = vmatpush1.xpose.msra.mxu0 0.0
    %705 = vmatprep.subr.mxu0 0.0
    %706 = vmatpush1.xpose.msra.mxu0 0.0
    %707 = vmatprep.subr.mxu0 0.0
    %708 = vmatpush1.xpose.msra.mxu0 0.0
    %709 = vmatprep.subr.mxu0 0.0
    %710 = vmatpush1.xpose.msra.mxu0 0.0
    %711 = vmatprep.subr.mxu0 0.0
    %712 = vmatpush1.xpose.msra.mxu0 0.0
    %713 = vmatprep.subr.mxu0 0.0
    %714 = vmatpush1.xpose.msra.mxu0 0.0
    %715 = vmatprep.subr.mxu0 0.0
    %716 = vmatpush1.xpose.msra.mxu0 0.0
    %717 = vmatprep.mubr.f32.mxu0 0.0
    %718 = vmatmul.mubr.f32.gmra.mrb[0].mxu0 %v645
    %v719 = vpop.f32.mrb[0].mxu0
    %v720 = vadd.f32 0.0, %v719
    %v721 = vpop.f32.mrb[0].mxu0
    %722 = vmatprep.mubr.f32.mxu0 0.0
    %723 = vmatmul.mubr.f32.gmra.mrb[0].mxu0 %v648
    %v724 = vpop.f32.mrb[0].mxu0
    %v725 = vadd.f32 0.0, %v724
    %v726 = vpop.f32.mrb[0].mxu0
    %727 = vdwg.mxu0
    %vm728 = vcmask 64512
    %v729 = vsel %vm728, %v636, -inf
    %730 = vmax.xlane.f32.xlu0 %v729
    %v731 = vpop.xlane.xlu0 %730
    %v732 = vsel %vm728, %v641, -inf
    %733 = vmax.xlane.f32.xlu0 %v732
    %v734 = vpop.xlane.xlu0 %733
    %v735 = vsel %vm728, %v720, -inf
    %736 = vmax.xlane.f32.xlu0 %v735
    %v737 = vpop.xlane.xlu0 %736
    %v738 = vsel %vm728, %v725, -inf
    %739 = vmax.xlane.f32.xlu0 %v738
    %v740 = vpop.xlane.xlu0 %739
    %v741 = vsub.f32 %v636, %v731
    %v742 = vsub.f32 %v641, %v734
    %v743 = vsub.f32 %v720, %v737
    %v744 = vsub.f32 %v725, %v740
    %v745 = vmul.f32 %v741, 1.442695
    %v746 = vpow.pop %v745
    %v747 = vmul.f32 %v742, 1.442695
    %v748 = vpow.pop %v747
    %v749 = vmul.f32 %v743, 1.442695
    %v750 = vpow.pop %v749
    %v751 = vmul.f32 %v744, 1.442695
    %v752 = vpow.pop %v751
    %v753 = vsel %vm728, %v746, 0.0
    %754 = vadd.xlane.f32.xlu0 %v753
    %v755 = vpop.xlane.xlu0 %754
    %v756 = vsel %vm728, %v748, 0.0
    %757 = vadd.xlane.f32.xlu0 %v756
    %v758 = vpop.xlane.xlu0 %757
    %v759 = vsel %vm728, %v750, 0.0
    %760 = vadd.xlane.f32.xlu0 %v759
    %v761 = vpop.xlane.xlu0 %760
    %v762 = vsel %vm728, %v752, 0.0
    %763 = vadd.xlane.f32.xlu0 %v762
    %v764 = vpop.xlane.xlu0 %763
    %v765 = vrcp.pop %v755
    %v766 = vrcp.pop %v758
    %v767 = vrcp.pop %v761
    %v768 = vrcp.pop %v764
    %v769 = vmul.f32 %v746, %v765
    %v770 = vmul.f32 %v748, %v766
    %v771 = vmul.f32 %v750, %v767
    %v772 = vmul.f32 %v752, %v768
    %773 = vrot.lane.b32.xlu0 %v548, 96
    %v774 = vpop.permute.xlu0 %773
    %v777 = vsel %vm728, %v769, 0
    %v780 = vsel %vm728, %v770, 0
    %782 = vmatprep.subr.mxu0 0.0
    %783 = vmatpush1.msra.mxu0 %v774
    %784 = vmatprep.subr.mxu0 0.0
    %785 = vmatpush1.msra.mxu0 0.0
    %786 = vmatprep.subr.mxu0 0.0
    %787 = vmatpush1.msra.mxu0 0.0
    %788 = vmatprep.subr.mxu0 0.0
    %789 = vmatpush1.msra.mxu0 0.0
    %790 = vmatprep.subr.mxu0 0.0
    %791 = vmatpush1.msra.mxu0 0.0
    %792 = vmatprep.subr.mxu0 0.0
    %793 = vmatpush1.msra.mxu0 0.0
    %794 = vmatprep.subr.mxu0 0.0
    %795 = vmatpush1.msra.mxu0 0.0
    %796 = vmatprep.subr.mxu0 0.0
    %797 = vmatpush1.msra.mxu0 0.0
    %798 = vmatprep.subr.mxu0 0.0
    %799 = vmatpush1.msra.mxu0 0.0
    %800 = vmatprep.subr.mxu0 0.0
    %801 = vmatpush1.msra.mxu0 0.0
    %802 = vmatprep.subr.mxu0 0.0
    %803 = vmatpush1.msra.mxu0 0.0
    %804 = vmatprep.subr.mxu0 0.0
    %805 = vmatpush1.msra.mxu0 0.0
    %806 = vmatprep.subr.mxu0 0.0
    %807 = vmatpush1.msra.mxu0 0.0
    %808 = vmatprep.subr.mxu0 0.0
    %809 = vmatpush1.msra.mxu0 0.0
    %810 = vmatprep.subr.mxu0 0.0
    %811 = vmatpush1.msra.mxu0 0.0
    %812 = vmatprep.subr.mxu0 0.0
    %813 = vmatpush1.msra.mxu0 0.0
    %814 = vmatprep.subr.mxu0 0.0
    %815 = vmatpush1.msra.mxu0 0.0
    %816 = vmatprep.subr.mxu0 0.0
    %817 = vmatpush1.msra.mxu0 0.0
    %818 = vmatprep.subr.mxu0 0.0
    %819 = vmatpush1.msra.mxu0 0.0
    %820 = vmatprep.subr.mxu0 0.0
    %821 = vmatpush1.msra.mxu0 0.0
    %822 = vmatprep.subr.mxu0 0.0
    %823 = vmatpush1.msra.mxu0 0.0
    %824 = vmatprep.subr.mxu0 0.0
    %825 = vmatpush1.msra.mxu0 0.0
    %826 = vmatprep.subr.mxu0 0.0
    %827 = vmatpush1.msra.mxu0 0.0
    %828 = vmatprep.subr.mxu0 0.0
    %829 = vmatpush1.msra.mxu0 0.0
    %830 = vmatprep.subr.mxu0 0.0
    %831 = vmatpush1.msra.mxu0 0.0
    %832 = vmatprep.subr.mxu0 0.0
    %833 = vmatpush1.msra.mxu0 0.0
    %834 = vmatprep.subr.mxu0 0.0
    %835 = vmatpush1.msra.mxu0 0.0
    %836 = vmatprep.subr.mxu0 0.0
    %837 = vmatpush1.msra.mxu0 0.0
    %838 = vmatprep.subr.mxu0 0.0
    %839 = vmatpush1.msra.mxu0 0.0
    %840 = vmatprep.subr.mxu0 0.0
    %841 = vmatpush1.msra.mxu0 0.0
    %842 = vmatprep.subr.mxu0 0.0
    %843 = vmatpush1.msra.mxu0 0.0
    %844 = vmatprep.subr.mxu0 0.0
    %845 = vmatpush1.msra.mxu0 0.0
    %846 = vmatprep.mubr.f32.mxu0 0.0
    %847 = vmatmul.mubr.f32.gmra.mrb[0].mxu0 %v777
    %v848 = vpop.f32.mrb[0].mxu0
    %v849 = vadd.f32 0.0, %v848
    %v850 = vpop.f32.mrb[0].mxu0
    %851 = vmatprep.mubr.f32.mxu0 0.0
    %852 = vmatmul.mubr.f32.gmra.mrb[0].mxu0 %v780
    %v853 = vpop.f32.mrb[0].mxu0
    %v854 = vadd.f32 0.0, %v853
    %v855 = vpop.f32.mrb[0].mxu0
    %856 = vdwg.mxu0
    %857 = vrot.lane.b32.xlu0 %v553, 96
    %v858 = vpop.permute.xlu0 %857
    %v861 = vsel %vm728, %v771, 0
    %v864 = vsel %vm728, %v772, 0
    %866 = vmatprep.subr.mxu0 0.0
    %867 = vmatpush1.msra.mxu0 %v858
    %868 = vmatprep.subr.mxu0 0.0
    %869 = vmatpush1.msra.mxu0 0.0
    %870 = vmatprep.subr.mxu0 0.0
    %871 = vmatpush1.msra.mxu0 0.0
    %872 = vmatprep.subr.mxu0 0.0
    %873 = vmatpush1.msra.mxu0 0.0
    %874 = vmatprep.subr.mxu0 0.0
    %875 = vmatpush1.msra.mxu0 0.0
    %876 = vmatprep.subr.mxu0 0.0
    %877 = vmatpush1.msra.mxu0 0.0
    %878 = vmatprep.subr.mxu0 0.0
    %879 = vmatpush1.msra.mxu0 0.0
    %880 = vmatprep.subr.mxu0 0.0
    %881 = vmatpush1.msra.mxu0 0.0
    %882 = vmatprep.subr.mxu0 0.0
    %883 = vmatpush1.msra.mxu0 0.0
    %884 = vmatprep.subr.mxu0 0.0
    %885 = vmatpush1.msra.mxu0 0.0
    %886 = vmatprep.subr.mxu0 0.0
    %887 = vmatpush1.msra.mxu0 0.0
    %888 = vmatprep.subr.mxu0 0.0
    %889 = vmatpush1.msra.mxu0 0.0
    %890 = vmatprep.subr.mxu0 0.0
    %891 = vmatpush1.msra.mxu0 0.0
    %892 = vmatprep.subr.mxu0 0.0
    %893 = vmatpush1.msra.mxu0 0.0
    %894 = vmatprep.subr.mxu0 0.0
    %895 = vmatpush1.msra.mxu0 0.0
    %896 = vmatprep.subr.mxu0 0.0
    %897 = vmatpush1.msra.mxu0 0.0
    %898 = vmatprep.subr.mxu0 0.0
    %899 = vmatpush1.msra.mxu0 0.0
    %900 = vmatprep.subr.mxu0 0.0
    %901 = vmatpush1.msra.mxu0 0.0
    %902 = vmatprep.subr.mxu0 0.0
    %903 = vmatpush1.msra.mxu0 0.0
    %904 = vmatprep.subr.mxu0 0.0
    %905 = vmatpush1.msra.mxu0 0.0
    %906 = vmatprep.subr.mxu0 0.0
    %907 = vmatpush1.msra.mxu0 0.0
    %908 = vmatprep.subr.mxu0 0.0
    %909 = vmatpush1.msra.mxu0 0.0
    %910 = vmatprep.subr.mxu0 0.0
    %911 = vmatpush1.msra.mxu0 0.0
    %912 = vmatprep.subr.mxu0 0.0
    %913 = vmatpush1.msra.mxu0 0.0
    %914 = vmatprep.subr.mxu0 0.0
    %915 = vmatpush1.msra.mxu0 0.0
    %916 = vmatprep.subr.mxu0 0.0
    %917 = vmatpush1.msra.mxu0 0.0
    %918 = vmatprep.subr.mxu0 0.0
    %919 = vmatpush1.msra.mxu0 0.0
    %920 = vmatprep.subr.mxu0 0.0
    %921 = vmatpush1.msra.mxu0 0.0
    %922 = vmatprep.subr.mxu0 0.0
    %923 = vmatpush1.msra.mxu0 0.0
    %924 = vmatprep.subr.mxu0 0.0
    %925 = vmatpush1.msra.mxu0 0.0
    %926 = vmatprep.subr.mxu0 0.0
    %927 = vmatpush1.msra.mxu0 0.0
    %928 = vmatprep.subr.mxu0 0.0
    %929 = vmatpush1.msra.mxu0 0.0
    %930 = vmatprep.mubr.f32.mxu0 0.0
    %931 = vmatmul.mubr.f32.gmra.mrb[0].mxu0 %v861
    %v932 = vpop.f32.mrb[0].mxu0
    %v933 = vadd.f32 0.0, %v932
    %v934 = vpop.f32.mrb[0].mxu0
    %935 = vmatprep.mubr.f32.mxu0 0.0
    %936 = vmatmul.mubr.f32.gmra.mrb[0].mxu0 %v864
    %v937 = vpop.f32.mrb[0].mxu0
    %v938 = vadd.f32 0.0, %v937
    %v939 = vpop.f32.mrb[0].mxu0
    %940 = vdwg.mxu0
    %v941 = vld [vmem:[#allocation13] sm:$0xff]
    %v942 = vld [vmem:[#allocation13 + $0x8] sm:$0xff]
    %v943 = vld [vmem:[#allocation13 + $0x10] sm:$0xff]
    %v944 = vld [vmem:[#allocation13 + $0x18] sm:$0xff]
    %v945 = vld [vmem:[#allocation14] sm:$0x1]
    %v947 = vlaneseq
    %v948 = vshrl.u32 %v947, 7
    %v949 = vsub.s32 0, %v948
    %v950 = vrot.slane %v945, %v949
    %v953 = vsel %vm366, %v849, 0
    %v956 = vsel %vm366, %v854, 0
    %v959 = vsel %vm366, %v933, 0
    %v962 = vsel %vm366, %v938, 0
    %964 = vmatprep.subr.mxu0 0.0
    %965 = vmatpush1.msra.mxu0 %v941
    %966 = vmatprep.subr.mxu0 0.0
    %967 = vmatpush1.msra.mxu0 %v942
    %968 = vmatprep.subr.mxu0 0.0
    %969 = vmatpush1.msra.mxu0 %v943
    %970 = vmatprep.subr.mxu0 0.0
    %971 = vmatpush1.msra.mxu0 %v944
    %972 = vmatprep.subr.mxu0 0.0
    %973 = vmatpush1.msra.mxu0 0.0
    %974 = vmatprep.subr.mxu0 0.0
    %975 = vmatpush1.msra.mxu0 0.0
    %976 = vmatprep.subr.mxu0 0.0
    %977 = vmatpush1.msra.mxu0 0.0
    %978 = vmatprep.subr.mxu0 0.0
    %979 = vmatpush1.msra.mxu0 0.0
    %980 = vmatprep.subr.mxu0 0.0
    %981 = vmatpush1.msra.mxu0 0.0
    %982 = vmatprep.subr.mxu0 0.0
    %983 = vmatpush1.msra.mxu0 0.0
    %984 = vmatprep.subr.mxu0 0.0
    %985 = vmatpush1.msra.mxu0 0.0
    %986 = vmatprep.subr.mxu0 0.0
    %987 = vmatpush1.msra.mxu0 0.0
    %988 = vmatprep.subr.mxu0 0.0
    %989 = vmatpush1.msra.mxu0 0.0
    %990 = vmatprep.subr.mxu0 0.0
    %991 = vmatpush1.msra.mxu0 0.0
    %992 = vmatprep.subr.mxu0 0.0
    %993 = vmatpush1.msra.mxu0 0.0
    %994 = vmatprep.subr.mxu0 0.0
    %995 = vmatpush1.msra.mxu0 0.0
    %996 = vmatprep.subr.mxu0 0.0
    %997 = vmatpush1.msra.mxu0 0.0
    %998 = vmatprep.subr.mxu0 0.0
    %999 = vmatpush1.msra.mxu0 0.0
    %1000 = vmatprep.subr.mxu0 0.0
    %1001 = vmatpush1.msra.mxu0 0.0
    %1002 = vmatprep.subr.mxu0 0.0
    %1003 = vmatpush1.msra.mxu0 0.0
    %1004 = vmatprep.subr.mxu0 0.0
    %1005 = vmatpush1.msra.mxu0 0.0
    %1006 = vmatprep.subr.mxu0 0.0
    %1007 = vmatpush1.msra.mxu0 0.0
    %1008 = vmatprep.subr.mxu0 0.0
    %1009 = vmatpush1.msra.mxu0 0.0
    %1010 = vmatprep.subr.mxu0 0.0
    %1011 = vmatpush1.msra.mxu0 0.0
    %1012 = vmatprep.subr.mxu0 0.0
    %1013 = vmatpush1.msra.mxu0 0.0
    %1014 = vmatprep.subr.mxu0 0.0
    %1015 = vmatpush1.msra.mxu0 0.0
    %1016 = vmatprep.subr.mxu0 0.0
    %1017 = vmatpush1.msra.mxu0 0.0
    %1018 = vmatprep.subr.mxu0 0.0
    %1019 = vmatpush1.msra.mxu0 0.0
    %1020 = vmatprep.subr.mxu0 0.0
    %1021 = vmatpush1.msra.mxu0 0.0
    %1022 = vmatprep.subr.mxu0 0.0
    %1023 = vmatpush1.msra.mxu0 0.0
    %1024 = vmatprep.subr.mxu0 0.0
    %1025 = vmatpush1.msra.mxu0 0.0
    %1026 = vmatprep.subr.mxu0 0.0
    %1027 = vmatpush1.msra.mxu0 0.0
    %1028 = vmatprep.mubr.f32.mxu0 0.0
    %1029 = vmatmul.mubr.f32.gmra.mrb[0].mxu0 %v953
    %v1030 = vpop.f32.mrb[0].mxu0
    %v1031 = vadd.f32 %v950, %v1030
    %v1032 = vpop.f32.mrb[0].mxu0
    %1033 = vmatprep.mubr.f32.mxu0 0.0
    %1034 = vmatmul.mubr.f32.gmra.mrb[0].mxu0 %v956
    %v1035 = vpop.f32.mrb[0].mxu0
    %v1036 = vadd.f32 %v950, %v1035
    %v1037 = vpop.f32.mrb[0].mxu0
    %1038 = vmatprep.mubr.f32.mxu0 0.0
    %1039 = vmatmul.mubr.f32.gmra.mrb[0].mxu0 %v959
    %v1040 = vpop.f32.mrb[0].mxu0
    %v1041 = vadd.f32 %v950, %v1040
    %v1042 = vpop.f32.mrb[0].mxu0
    %1043 = vmatprep.mubr.f32.mxu0 0.0
    %1044 = vmatmul.mubr.f32.gmra.mrb[0].mxu0 %v962
    %v1045 = vpop.f32.mrb[0].mxu0
    %v1046 = vadd.f32 %v950, %v1045
    %v1047 = vpop.f32.mrb[0].mxu0
    %1048 = vdwg.mxu0
    %v1049 = vld [vmem:[#allocation16] sm:$0xff]
    %v1050 = vld [vmem:[#allocation16 + $0x8] sm:$0xff]
    %v1051 = vld [vmem:[#allocation16 + $0x10] sm:$0xff]
    %v1052 = vld [vmem:[#allocation16 + $0x18] sm:$0xff]
    %v1053 = vld [vmem:[#allocation17] sm:$0xff]
    %v1054 = vld [vmem:[#allocation17 + $0x8] sm:$0xff]
    %v1055 = vld [vmem:[#allocation17 + $0x10] sm:$0xff]
    %v1056 = vld [vmem:[#allocation17 + $0x18] sm:$0xff]
    %v1058 = vsel %vm366, %v1031, 0
    %v1061 = vsel %vm366, %v1036, 0
    %v1064 = vsel %vm366, %v1041, 0
    %v1067 = vsel %vm366, %v1046, 0
    %1069 = vmatprep.subr.mxu0 0.0
    %1070 = vmatpush1.msra.mxu0 %v1053
    %1071 = vmatprep.subr.mxu0 0.0
    %1072 = vmatpush1.msra.mxu0 %v1054
    %1073 = vmatprep.subr.mxu0 0.0
    %1074 = vmatpush1.msra.mxu0 %v1055
    %1075 = vmatprep.subr.mxu0 0.0
    %1076 = vmatpush1.msra.mxu0 %v1056
    %1077 = vmatprep.subr.mxu0 0.0
    %1078 = vmatpush1.msra.mxu0 0.0
    %1079 = vmatprep.subr.mxu0 0.0
    %1080 = vmatpush1.msra.mxu0 0.0
    %1081 = vmatprep.subr.mxu0 0.0
    %1082 = vmatpush1.msra.mxu0 0.0
    %1083 = vmatprep.subr.mxu0 0.0
    %1084 = vmatpush1.msra.mxu0 0.0
    %1085 = vmatprep.subr.mxu0 0.0
    %1086 = vmatpush1.msra.mxu0 0.0
    %1087 = vmatprep.subr.mxu0 0.0
    %1088 = vmatpush1.msra.mxu0 0.0
    %1089 = vmatprep.subr.mxu0 0.0
    %1090 = vmatpush1.msra.mxu0 0.0
    %1091 = vmatprep.subr.mxu0 0.0
    %1092 = vmatpush1.msra.mxu0 0.0
    %1093 = vmatprep.subr.mxu0 0.0
    %1094 = vmatpush1.msra.mxu0 0.0
    %1095 = vmatprep.subr.mxu0 0.0
    %1096 = vmatpush1.msra.mxu0 0.0
    %1097 = vmatprep.subr.mxu0 0.0
    %1098 = vmatpush1.msra.mxu0 0.0
    %1099 = vmatprep.subr.mxu0 0.0
    %1100 = vmatpush1.msra.mxu0 0.0
    %1101 = vmatprep.subr.mxu0 0.0
    %1102 = vmatpush1.msra.mxu0 0.0
    %1103 = vmatprep.subr.mxu0 0.0
    %1104 = vmatpush1.msra.mxu0 0.0
    %1105 = vmatprep.subr.mxu0 0.0
    %1106 = vmatpush1.msra.mxu0 0.0
    %1107 = vmatprep.subr.mxu0 0.0
    %1108 = vmatpush1.msra.mxu0 0.0
    %1109 = vmatprep.subr.mxu0 0.0
    %1110 = vmatpush1.msra.mxu0 0.0
    %1111 = vmatprep.subr.mxu0 0.0
    %1112 = vmatpush1.msra.mxu0 0.0
    %1113 = vmatprep.subr.mxu0 0.0
    %1114 = vmatpush1.msra.mxu0 0.0
    %1115 = vmatprep.subr.mxu0 0.0
    %1116 = vmatpush1.msra.mxu0 0.0
    %1117 = vmatprep.subr.mxu0 0.0
    %1118 = vmatpush1.msra.mxu0 0.0
    %1119 = vmatprep.subr.mxu0 0.0
    %1120 = vmatpush1.msra.mxu0 0.0
    %1121 = vmatprep.subr.mxu0 0.0
    %1122 = vmatpush1.msra.mxu0 0.0
    %1123 = vmatprep.subr.mxu0 0.0
    %1124 = vmatpush1.msra.mxu0 0.0
    %1125 = vmatprep.subr.mxu0 0.0
    %1126 = vmatpush1.msra.mxu0 0.0
    %1127 = vmatprep.subr.mxu0 0.0
    %1128 = vmatpush1.msra.mxu0 0.0
    %1129 = vmatprep.subr.mxu0 0.0
    %1130 = vmatpush1.msra.mxu0 0.0
    %1131 = vmatprep.subr.mxu0 0.0
    %1132 = vmatpush1.msra.mxu0 0.0
    %1133 = vmatprep.mubr.f32.mxu0 0.0
    %1134 = vmatmul.mubr.f32.gmra.mrb[0].mxu0 %v1058
    %v1135 = vpop.f32.mrb[0].mxu0
    %v1136 = vadd.f32 0.0, %v1135
    %v1137 = vpop.f32.mrb[0].mxu0
    %1138 = vmatprep.mubr.f32.mxu0 0.0
    %1139 = vmatmul.mubr.f32.gmra.mrb[0].mxu0 %v1061
    %v1140 = vpop.f32.mrb[0].mxu0
    %v1141 = vadd.f32 0.0, %v1140
    %v1142 = vpop.f32.mrb[0].mxu0
    %1143 = vmatprep.mubr.f32.mxu0 0.0
    %1144 = vmatmul.mubr.f32.gmra.mrb[0].mxu0 %v1064
    %v1145 = vpop.f32.mrb[0].mxu0
    %v1146 = vadd.f32 0.0, %v1145
    %v1147 = vpop.f32.mrb[0].mxu0
    %1148 = vmatprep.mubr.f32.mxu0 0.0
    %1149 = vmatmul.mubr.f32.gmra.mrb[0].mxu0 %v1067
    %v1150 = vpop.f32.mrb[0].mxu0
    %v1151 = vadd.f32 0.0, %v1150
    %v1152 = vpop.f32.mrb[0].mxu0
    %1153 = vdwg.mxu0
    %1154 = vmatprep.subr.mxu0 0.0
    %1155 = vmatpush1.msra.mxu0 %v1049
    %1156 = vmatprep.subr.mxu0 0.0
    %1157 = vmatpush1.msra.mxu0 %v1050
    %1158 = vmatprep.subr.mxu0 0.0
    %1159 = vmatpush1.msra.mxu0 %v1051
    %1160 = vmatprep.subr.mxu0 0.0
    %1161 = vmatpush1.msra.mxu0 %v1052
    %1162 = vmatprep.subr.mxu0 0.0
    %1163 = vmatpush1.msra.mxu0 0.0
    %1164 = vmatprep.subr.mxu0 0.0
    %1165 = vmatpush1.msra.mxu0 0.0
    %1166 = vmatprep.subr.mxu0 0.0
    %1167 = vmatpush1.msra.mxu0 0.0
    %1168 = vmatprep.subr.mxu0 0.0
    %1169 = vmatpush1.msra.mxu0 0.0
    %1170 = vmatprep.subr.mxu0 0.0
    %1171 = vmatpush1.msra.mxu0 0.0
    %1172 = vmatprep.subr.mxu0 0.0
    %1173 = vmatpush1.msra.mxu0 0.0
    %1174 = vmatprep.subr.mxu0 0.0
    %1175 = vmatpush1.msra.mxu0 0.0
    %1176 = vmatprep.subr.mxu0 0.0
    %1177 = vmatpush1.msra.mxu0 0.0
    %1178 = vmatprep.subr.mxu0 0.0
    %1179 = vmatpush1.msra.mxu0 0.0
    %1180 = vmatprep.subr.mxu0 0.0
    %1181 = vmatpush1.msra.mxu0 0.0
    %1182 = vmatprep.subr.mxu0 0.0
    %1183 = vmatpush1.msra.mxu0 0.0
    %1184 = vmatprep.subr.mxu0 0.0
    %1185 = vmatpush1.msra.mxu0 0.0
    %1186 = vmatprep.subr.mxu0 0.0
    %1187 = vmatpush1.msra.mxu0 0.0
    %1188 = vmatprep.subr.mxu0 0.0
    %1189 = vmatpush1.msra.mxu0 0.0
    %1190 = vmatprep.subr.mxu0 0.0
    %1191 = vmatpush1.msra.mxu0 0.0
    %1192 = vmatprep.subr.mxu0 0.0
    %1193 = vmatpush1.msra.mxu0 0.0
    %1194 = vmatprep.subr.mxu0 0.0
    %1195 = vmatpush1.msra.mxu0 0.0
    %1196 = vmatprep.subr.mxu0 0.0
    %1197 = vmatpush1.msra.mxu0 0.0
    %1198 = vmatprep.subr.mxu0 0.0
    %1199 = vmatpush1.msra.mxu0 0.0
    %1200 = vmatprep.subr.mxu0 0.0
    %1201 = vmatpush1.msra.mxu0 0.0
    %1202 = vmatprep.subr.mxu0 0.0
    %1203 = vmatpush1.msra.mxu0 0.0
    %1204 = vmatprep.subr.mxu0 0.0
    %1205 = vmatpush1.msra.mxu0 0.0
    %1206 = vmatprep.subr.mxu0 0.0
    %1207 = vmatpush1.msra.mxu0 0.0
    %1208 = vmatprep.subr.mxu0 0.0
    %1209 = vmatpush1.msra.mxu0 0.0
    %1210 = vmatprep.subr.mxu0 0.0
    %1211 = vmatpush1.msra.mxu0 0.0
    %1212 = vmatprep.subr.mxu0 0.0
    %1213 = vmatpush1.msra.mxu0 0.0
    %1214 = vmatprep.subr.mxu0 0.0
    %1215 = vmatpush1.msra.mxu0 0.0
    %1216 = vmatprep.subr.mxu0 0.0
    %1217 = vmatpush1.msra.mxu0 0.0
    %1218 = vmatprep.mubr.f32.mxu0 0.0
    %1219 = vmatmul.mubr.f32.gmra.mrb[0].mxu0 %v368
    %v1220 = vpop.f32.mrb[0].mxu0
    %v1221 = vadd.f32 %v1136, %v1220
    %v1222 = vpop.f32.mrb[0].mxu0
    %1223 = vmatprep.mubr.f32.mxu0 0.0
    %1224 = vmatmul.mubr.f32.gmra.mrb[0].mxu0 %v371
    %v1225 = vpop.f32.mrb[0].mxu0
    %v1226 = vadd.f32 %v1141, %v1225
    %v1227 = vpop.f32.mrb[0].mxu0
    %1228 = vmatprep.mubr.f32.mxu0 0.0
    %1229 = vmatmul.mubr.f32.gmra.mrb[0].mxu0 %v374
    %v1230 = vpop.f32.mrb[0].mxu0
    %v1231 = vadd.f32 %v1146, %v1230
    %v1232 = vpop.f32.mrb[0].mxu0
    %1233 = vmatprep.mubr.f32.mxu0 0.0
    %1234 = vmatmul.mubr.f32.gmra.mrb[0].mxu0 %v377
    %v1235 = vpop.f32.mrb[0].mxu0
    %v1236 = vadd.f32 %v1151, %v1235
    %v1237 = vpop.f32.mrb[0].mxu0
    %1238 = vdwg.mxu0
    %v1239 = vld [vmem:[#allocation19] sm:$0x1]
    %v1241 = vlaneseq
    %v1242 = vshrl.u32 %v1241, 7
    %v1243 = vsub.s32 0, %v1242
    %v1244 = vrot.slane %v1239, %v1243
    %v1246 = vadd.f32 %v1221, %v1244
    %v1247 = vadd.f32 %v1226, %v1244
    %v1248 = vadd.f32 %v1231, %v1244
    %v1249 = vadd.f32 %v1236, %v1244
    %vm1250 = vcmask 523264
    %v1251 = vsel %vm1250, %v1246, 0.0
    %v1252 = vsel %vm1250, %v1247, 0.0
    %v1253 = vadd.f32 %v1251, %v1252
    %v1254 = vrot.slane %v1253, 4
    %v1255 = vadd.f32 %v1253, %v1254
    %v1256 = vrot.slane %v1255, 2
    %v1257 = vadd.f32 %v1255, %v1256
    %v1258 = vrot.slane %v1257, 1
    %v1259 = vadd.f32 %v1257, %v1258
    %v1260 = vsel %vm1250, %v1248, 0.0
    %v1261 = vsel %vm1250, %v1249, 0.0
    %v1262 = vadd.f32 %v1260, %v1261
    %v1263 = vrot.slane %v1262, 4
    %v1264 = vadd.f32 %v1262, %v1263
    %v1265 = vrot.slane %v1264, 2
    %v1266 = vadd.f32 %v1264, %v1265
    %v1267 = vrot.slane %v1266, 1
    %v1268 = vadd.f32 %v1266, %v1267
    %v1269 = vrcp.pop 16.0
    %v1270 = vmul.f32 %v1259, %v1269
    %v1271 = vmul.f32 %v1268, %v1269
    %v1272 = vsub.f32 %v1246, %v1270
    %v1273 = vsub.f32 %v1247, %v1270
    %v1274 = vsub.f32 %v1248, %v1271
    %v1275 = vsub.f32 %v1249, %v1271
    %v1276 = vmul.f32 %v1272, %v1272
    %v1277 = vmul.f32 %v1273, %v1273
    %v1278 = vmul.f32 %v1274, %v1274
    %v1279 = vmul.f32 %v1275, %v1275
    %v1280 = vsel %vm1250, %v1276, 0.0
    %v1281 = vsel %vm1250, %v1277, 0.0
    %v1282 = vadd.f32 %v1280, %v1281
    %v1283 = vrot.slane %v1282, 4
    %v1284 = vadd.f32 %v1282, %v1283
    %v1285 = vrot.slane %v1284, 2
    %v1286 = vadd.f32 %v1284, %v1285
    %v1287 = vrot.slane %v1286, 1
    %v1288 = vadd.f32 %v1286, %v1287
    %v1289 = vsel %vm1250, %v1278, 0.0
    %v1290 = vsel %vm1250, %v1279, 0.0
    %v1291 = vadd.f32 %v1289, %v1290
    %v1292 = vrot.slane %v1291, 4
    %v1293 = vadd.f32 %v1291, %v1292
    %v1294 = vrot.slane %v1293, 2
    %v1295 = vadd.f32 %v1293, %v1294
    %v1296 = vrot.slane %v1295, 1
    %v1297 = vadd.f32 %v1295, %v1296
    %v1298 = vmul.f32 %v1288, %v1269
    %v1299 = vmul.f32 %v1297, %v1269
    %v1300 = vadd.f32 %v1298, 1e-05
    %v1301 = vadd.f32 %v1299, 1e-05
    %v1302 = vrsqrt.pop %v1300
    %v1303 = vrsqrt.pop %v1301
    %v1304 = vmul.f32 %v1272, %v1302
    %v1305 = vmul.f32 %v1273, %v1302
    %v1306 = vmul.f32 %v1274, %v1303
    %v1307 = vmul.f32 %v1275, %v1303
    %v1308 = vmax.f32 %v1304, 0.0
    %v1309 = vmax.f32 %v1305, 0.0
    %v1310 = vmax.f32 %v1306, 0.0
    %v1311 = vmax.f32 %v1307, 0.0
    %v1312 = vld [vmem:[#allocation20] sm:$0xff]
    %v1313 = vld [vmem:[#allocation20 + $0x8] sm:$0xff]
    %v1314 = vld [vmem:[#allocation20 + $0x10] sm:$0xff]
    %v1315 = vld [vmem:[#allocation20 + $0x18] sm:$0xff]
    %v1316 = vld [vmem:[#allocation20 + $0x20] sm:$0xff]
    %v1317 = vld [vmem:[#allocation20 + $0x28] sm:$0xff]
    %v1318 = vld [vmem:[#allocation20 + $0x30] sm:$0xff]
    %v1319 = vld [vmem:[#allocation20 + $0x38] sm:$0xff]
    %v1320 = vld [vmem:[#allocation22] sm:$0x1]
    %v1322 = vlaneseq
    %v1323 = vshrl.u32 %v1322, 7
    %v1324 = vsub.s32 0, %v1323
    %v1325 = vrot.slane %v1320, %v1324
    %v1328 = vsel %vm1250, %v1308, 0
    %v1331 = vsel %vm1250, %v1309, 0
    %v1334 = vsel %vm1250, %v1310, 0
    %v1337 = vsel %vm1250, %v1311, 0
    %1339 = vmatprep.subr.mxu0 0.0
    %1340 = vmatpush1.msra.mxu0 %v1312
    %1341 = vmatprep.subr.mxu0 0.0
    %1342 = vmatpush1.msra.mxu0 %v1313
    %1343 = vmatprep.subr.mxu0 0.0
    %1344 = vmatpush1.msra.mxu0 %v1314
    %1345 = vmatprep.subr.mxu0 0.0
    %1346 = vmatpush1.msra.mxu0 %v1315
    %1347 = vmatprep.subr.mxu0 0.0
    %1348 = vmatpush1.msra.mxu0 %v1316
    %1349 = vmatprep.subr.mxu0 0.0
    %1350 = vmatpush1.msra.mxu0 %v1317
    %1351 = vmatprep.subr.mxu0 0.0
    %1352 = vmatpush1.msra.mxu0 %v1318
    %1353 = vmatprep.subr.mxu0 0.0
    %1354 = vmatpush1.msra.mxu0 %v1319
    %1355 = vmatprep.subr.mxu0 0.0
    %1356 = vmatpush1.msra.mxu0 0.0
    %1357 = vmatprep.subr.mxu0 0.0
    %1358 = vmatpush1.msra.mxu0 0.0
    %1359 = vmatprep.subr.mxu0 0.0
    %1360 = vmatpush1.msra.mxu0 0.0
    %1361 = vmatprep.subr.mxu0 0.0
    %1362 = vmatpush1.msra.mxu0 0.0
    %1363 = vmatprep.subr.mxu0 0.0
    %1364 = vmatpush1.msra.mxu0 0.0
    %1365 = vmatprep.subr.mxu0 0.0
    %1366 = vmatpush1.msra.mxu0 0.0
    %1367 = vmatprep.subr.mxu0 0.0
    %1368 = vmatpush1.msra.mxu0 0.0
    %1369 = vmatprep.subr.mxu0 0.0
    %1370 = vmatpush1.msra.mxu0 0.0
    %1371 = vmatprep.subr.mxu0 0.0
    %1372 = vmatpush1.msra.mxu0 0.0
    %1373 = vmatprep.subr.mxu0 0.0
    %1374 = vmatpush1.msra.mxu0 0.0
    %1375 = vmatprep.subr.mxu0 0.0
    %1376 = vmatpush1.msra.mxu0 0.0
    %1377 = vmatprep.subr.mxu0 0.0
    %1378 = vmatpush1.msra.mxu0 0.0
    %1379 = vmatprep.subr.mxu0 0.0
    %1380 = vmatpush1.msra.mxu0 0.0
    %1381 = vmatprep.subr.mxu0 0.0
    %1382 = vmatpush1.msra.mxu0 0.0
    %1383 = vmatprep.subr.mxu0 0.0
    %1384 = vmatpush1.msra.mxu0 0.0
    %1385 = vmatprep.subr.mxu0 0.0
    %1386 = vmatpush1.msra.mxu0 0.0
    %1387 = vmatprep.subr.mxu0 0.0
    %1388 = vmatpush1.msra.mxu0 0.0
    %1389 = vmatprep.subr.mxu0 0.0
    %1390 = vmatpush1.msra.mxu0 0.0
    %1391 = vmatprep.subr.mxu0 0.0
    %1392 = vmatpush1.msra.mxu0 0.0
    %1393 = vmatprep.subr.mxu0 0.0
    %1394 = vmatpush1.msra.mxu0 0.0
    %1395 = vmatprep.subr.mxu0 0.0
    %1396 = vmatpush1.msra.mxu0 0.0
    %1397 = vmatprep.subr.mxu0 0.0
    %1398 = vmatpush1.msra.mxu0 0.0
    %1399 = vmatprep.subr.mxu0 0.0
    %1400 = vmatpush1.msra.mxu0 0.0
    %1401 = vmatprep.subr.mxu0 0.0
    %1402 = vmatpush1.msra.mxu0 0.0
    %1403 = vmatprep.mubr.f32.mxu0 0.0
    %1404 = vmatmul.mubr.f32.gmra.mrb[0].mxu0 %v1328
    %v1405 = vpop.f32.mrb[0].mxu0
    %v1406 = vadd.f32 %v1325, %v1405
    %v1407 = vpop.f32.mrb[0].mxu0
    %1408 = vmatprep.mubr.f32.mxu0 0.0
    %1409 = vmatmul.mubr.f32.gmra.mrb[0].mxu0 %v1331
    %v1410 = vpop.f32.mrb[0].mxu0
    %v1411 = vadd.f32 %v1325, %v1410
    %v1412 = vpop.f32.mrb[0].mxu0
    %1413 = vmatprep.mubr.f32.mxu0 0.0
    %1414 = vmatmul.mubr.f32.gmra.mrb[0].mxu0 %v1334
    %v1415 = vpop.f32.mrb[0].mxu0
    %v1416 = vadd.f32 %v1325, %v1415
    %v1417 = vpop.f32.mrb[0].mxu0
    %1418 = vmatprep.mubr.f32.mxu0 0.0
    %1419 = vmatmul.mubr.f32.gmra.mrb[0].mxu0 %v1337
    %v1420 = vpop.f32.mrb[0].mxu0
    %v1421 = vadd.f32 %v1325, %v1420
    %v1422 = vpop.f32.mrb[0].mxu0
    %1423 = vdwg.mxu0
    %1424 = vxpose.xlu0.b32.start [1/16] %v1406, 128
    %1425 = vxpose.xlu0.b32.cont [2/16] %v1411, 128
    %1426 = vxpose.xlu0.b32.cont [3/16] 0.0, 128
    %1427 = vxpose.xlu0.b32.cont [4/16] 0.0, 128
    %1428 = vxpose.xlu0.b32.cont [5/16] 0.0, 128
    %1429 = vxpose.xlu0.b32.cont [6/16] 0.0, 128
    %1430 = vxpose.xlu0.b32.cont [7/16] 0.0, 128
    %1431 = vxpose.xlu0.b32.cont [8/16] 0.0, 128
    %1432 = vxpose.xlu0.b32.cont [9/16] 0.0, 128
    %1433 = vxpose.xlu0.b32.cont [10/16] 0.0, 128
    %1434 = vxpose.xlu0.b32.cont [11/16] 0.0, 128
    %1435 = vxpose.xlu0.b32.cont [12/16] 0.0, 128
    %1436 = vxpose.xlu0.b32.cont [13/16] 0.0, 128
    %1437 = vxpose.xlu0.b32.cont [14/16] 0.0, 128
    %1438 = vxpose.xlu0.b32.cont [15/16] 0.0, 128
    %1439 = vxpose.xlu0.b32.end [16/16] 0.0, 128
    %v1440 = vpop.trf.xlu0
    %v1441 = vpop.trf.xlu0
    %v1442 = vpop.trf.xlu0
    %v1443 = vpop.trf.xlu0
    %v1444 = vpop.trf.xlu0
    %v1445 = vpop.trf.xlu0
    %v1446 = vpop.trf.xlu0
    %v1447 = vpop.trf.xlu0
    %v1448 = vpop.trf.xlu0
    %v1449 = vpop.trf.xlu0
    %v1450 = vpop.trf.xlu0
    %v1451 = vpop.trf.xlu0
    %v1452 = vpop.trf.xlu0
    %v1453 = vpop.trf.xlu0
    %v1454 = vpop.trf.xlu0
    %v1455 = vpop.trf.xlu0
    %1456 = vxpose.xlu0.b32.start [1/16] %v1416, 128
    %1457 = vxpose.xlu0.b32.cont [2/16] %v1421, 128
    %1458 = vxpose.xlu0.b32.cont [3/16] 0.0, 128
    %1459 = vxpose.xlu0.b32.cont [4/16] 0.0, 128
    %1460 = vxpose.xlu0.b32.cont [5/16] 0.0, 128
    %1461 = vxpose.xlu0.b32.cont [6/16] 0.0, 128
    %1462 = vxpose.xlu0.b32.cont [7/16] 0.0, 128
    %1463 = vxpose.xlu0.b32.cont [8/16] 0.0, 128
    %1464 = vxpose.xlu0.b32.cont [9/16] 0.0, 128
    %1465 = vxpose.xlu0.b32.cont [10/16] 0.0, 128
    %1466 = vxpose.xlu0.b32.cont [11/16] 0.0, 128
    %1467 = vxpose.xlu0.b32.cont [12/16] 0.0, 128
    %1468 = vxpose.xlu0.b32.cont [13/16] 0.0, 128
    %1469 = vxpose.xlu0.b32.cont [14/16] 0.0, 128
    %1470 = vxpose.xlu0.b32.cont [15/16] 0.0, 128
    %1471 = vxpose.xlu0.b32.end [16/16] 0.0, 128
    %v1472 = vpop.trf.xlu0
    %v1473 = vpop.trf.xlu0
    %v1474 = vpop.trf.xlu0
    %v1475 = vpop.trf.xlu0
    %v1476 = vpop.trf.xlu0
    %v1477 = vpop.trf.xlu0
    %v1478 = vpop.trf.xlu0
    %v1479 = vpop.trf.xlu0
    %v1480 = vpop.trf.xlu0
    %v1481 = vpop.trf.xlu0
    %v1482 = vpop.trf.xlu0
    %v1483 = vpop.trf.xlu0
    %v1484 = vpop.trf.xlu0
    %v1485 = vpop.trf.xlu0
    %v1486 = vpop.trf.xlu0
    %v1487 = vpop.trf.xlu0
    %v1488 = vadd.f32 %v211, %v1440
    %v1489 = vadd.f32 %v212, %v1441
    %v1490 = vadd.f32 %v213, %v1442
    %v1491 = vadd.f32 %v214, %v1443
    %v1492 = vadd.f32 %v215, %v1472
    %v1493 = vadd.f32 %v216, %v1473
    %v1494 = vadd.f32 %v217, %v1474
    %v1495 = vadd.f32 %v218, %v1475
    %vm1496 = vcmask 130048
    %1497 = vst.msk [vmem:[#allocation23] sm:$0xff] %vm1496, %v1488
    %1498 = vst.msk [vmem:[#allocation23 + $0x8] sm:$0xff] %vm1496, %v1489
    %1499 = vst.msk [vmem:[#allocation23 + $0x10] sm:$0xff] %vm1496, %v1490
    %1500 = vst.msk [vmem:[#allocation23 + $0x18] sm:$0xff] %vm1496, %v1491
    %1501 = vst.msk [vmem:[#allocation23 + $0x20] sm:$0xff] %vm1496, %v1492
    %1502 = vst.msk [vmem:[#allocation23 + $0x28] sm:$0xff] %vm1496, %v1493
    %1503 = vst.msk [vmem:[#allocation23 + $0x30] sm:$0xff] %vm1496, %v1494
    %1504 = vst.msk [vmem:[#allocation23 + $0x38] sm:$0xff] %vm1496, %v1495
    // Predicated region
    $region106: #{tpu_custom_call.1} parent=1 // pred_check
      _
    $region107: #{tpu_custom_call.1} parent=1 // pred_check_branch
      %1506 = sbr.rel (0) target = $region109
    $region108: #{tpu_custom_call.1} parent=1 // pred_region
      %s1508 = ssub.s32 1024, 1024
      %1509 = vsyncadd [#allocation4], %s1508
      %s1510 = sshll.u32 [#allocation23], 4
      %s1511 = int_to_ptr.vmem [resolvable:$true] %s1510
      %1516 = dma.vmem_to_hbm [thread:$0]  %s1511, 1024, %s13, [#allocation4], 128, 128, 8
    $region109: #{tpu_custom_call.1} parent=1 // pred_fallthru
      _
    // Predicated region
    $region110: #{tpu_custom_call.1} parent=1 // pred_check
      _
    $region111: #{tpu_custom_call.1} parent=1 // pred_check_branch
      %1518 = sbr.rel (0) target = $region113
    $region112: #{tpu_custom_call.1} parent=1 // pred_region
      %1519 = dma.done [#allocation4], 1024
    $region113: #{tpu_custom_call.1} parent=1 // pred_fallthru
      _
    %1520 = vsyncpa [#allocation3], 1
    %1521 = vsyncpa [#allocation6], 1
    %1522 = vsyncpa [#allocation9], 1
    %1523 = vsyncpa [#allocation12], 1
    %1524 = vsyncpa [#allocation15], 1
    %1525 = vsyncpa [#allocation18], 1
    %1526 = vsyncpa [#allocation21], 1
    %1527 = vsyncpa [#allocation4], 1

</llo_original>
